<compile_context>
chip_gen: v5e
topology: v5e:2x2
jax: 0.10.0
libtpu: 0.0.40
codegen_flags: <defaults>
</compile_context>

<pallas_src>
import functools

import jax
import jax.numpy as jnp
import numpy as np
from jax.experimental import pallas as pl
from jax.experimental.pallas import tpu as pltpu


# ----------------------------------------------------------------------------
# Pointwise (1x1-conv) matmul kernel, tiled over position rows.  Used once,
# outside the recurrence, to produce input gates + residual for every skewed
# column position in a single MXU pass with a lane-dense (6K) output.
# ----------------------------------------------------------------------------
def pw_matmul_kernel(x_ref, w_ref, b_ref, o_ref):
    o_ref[...] = (jnp.dot(x_ref[...], w_ref[...],
                          preferred_element_type=jnp.float32) + b_ref[...])


def pointwise_matmul(x2d, w, b, *, max_block_rows=1024):
    R, C = x2d.shape
    N = w.shape[1]
    block_rows = R if R <= max_block_rows else max_block_rows
    grid_r = pl.cdiv(R, block_rows)
    return pl.pallas_call(
        pw_matmul_kernel,
        out_shape=jax.ShapeDtypeStruct((R, N), jnp.float32),
        grid=(grid_r,),
        in_specs=[
            pl.BlockSpec((block_rows, C), lambda i: (i, 0)),
            pl.BlockSpec((C, N), lambda i: (0, 0)),
            pl.BlockSpec((1, N), lambda i: (0, 0)),
        ],
        out_specs=pl.BlockSpec((block_rows, N), lambda i: (i, 0)),
        compiler_params=pltpu.CompilerParams(
            dimension_semantics=("parallel",)),
    )(x2d, w, b.reshape(1, N))


# ----------------------------------------------------------------------------
# Recurrent kernel: single invocation, fori_loop over the SW skewed columns.
# ----------------------------------------------------------------------------
def dlstm_kernel(gates_ref, res_ref, w_ref, out_ref, *, H):
    # gates_ref: (SW, BH, 5K)  precomputed  x @ w_is + (b_is + b_ss)
    # res_ref:   (SW, BH, K)   precomputed  x @ w_res + b_res (skewed layout)
    # w_ref:     (2K, 5K)      [w_ss0; w_ss1] fused recurrent weights
    # out_ref:   (SW, BH, K)   h + residual, skewed layout
    SW, BH, K = out_ref.shape

    w_cat = w_ref[...]                                   # hoisted weight load
    # First-image-row mask, hoisted out of the loop (0.0 where row h == 0).
    row_id = jax.lax.broadcasted_iota(jnp.int32, (BH, 1), 0)
    keep = (row_id % H != 0).astype(jnp.float32)

    def step(i, carry):
        h_prev, c_prev = carry
        # Shift state down one image row: XLU roll + mask.  The mask zeroes
        # row 0 of every batch item (and the cross-batch wraparound row).
        h_up = pltpu.roll(h_prev, shift=1, axis=0) * keep
        c_up = pltpu.roll(c_prev, shift=1, axis=0) * keep
        # Fused recurrent matmul: [h_up | h_prev] @ [w_ss0; w_ss1]
        hh = jnp.concatenate([h_up, h_prev], axis=1)     # (BH, 2K)
        gates = gates_ref[i] + jnp.dot(hh, w_cat,
                                       preferred_element_type=jnp.float32)
        sig = jax.nn.sigmoid(gates[:, :4 * K])           # o, f_left, f_up, i
        o = sig[:, 0 * K:1 * K]
        f_left = sig[:, 1 * K:2 * K]
        f_up = sig[:, 2 * K:3 * K]
        i_g = sig[:, 3 * K:4 * K]
        g = jnp.tanh(gates[:, 4 * K:5 * K])
        c = f_left * c_prev + f_up * c_up + i_g * g
        h = o * jnp.tanh(c)
        out_ref[i] = h + res_ref[i]
        return h, c

    init = (jnp.zeros((BH, K), jnp.float32),
            jnp.zeros((BH, K), jnp.float32))
    jax.lax.fori_loop(0, SW, step, init, unroll=True)


# ----------------------------------------------------------------------------
# Glue: skew / unskew via a single pad + reshape (no Python loops).
# ----------------------------------------------------------------------------
def skew_nchw(x):
    # out[b, c, r, r:r+W] = x[b, c, r, :]
    B, C, H, W = x.shape
    SW = H + W - 1
    xp = jnp.pad(x, ((0, 0), (0, 0), (0, 0), (0, H)))          # (B,C,H,W+H)
    flat = xp.reshape(B, C, H * (H + W))[:, :, :H * SW]
    return flat.reshape(B, C, H, SW)


def unskew_nchw(t):
    # out[b, c, r, :] = t[b, c, r, r:r+W]
    B, C, H, SW = t.shape
    W = SW - H + 1
    flat = jnp.pad(t.reshape(B, C, H * SW), ((0, 0), (0, 0), (0, H)))
    return flat.reshape(B, C, H, H + W)[:, :, :, :W]


def diagonal_lstm_forward(x, params, hidden_dim):
    B, C, H, W = x.shape
    SW = H + W - 1
    K = hidden_dim
    BH = B * H

    skewed = skew_nchw(x)                                      # (B, C, H, SW)
    x_cols = jnp.transpose(skewed, (3, 0, 2, 1)).reshape(SW * BH, C)

    # One pointwise matmul for input gates + residual; biases folded in.
    w_all = jnp.concatenate([params["w_is"], params["w_res"]], axis=1)  # (C,6K)
    b_all = jnp.concatenate([params["b_is"] + params["b_ss"],
                             params["b_res"]])                          # (6K,)
    pw = pointwise_matmul(x_cols, w_all, b_all)                # (SW*BH, 6K)
    gates_in = pw[:, :5 * K].reshape(SW, BH, 5 * K)
    res_cols = pw[:, 5 * K:].reshape(SW, BH, K)

    # Fused recurrent weight [w_ss0; w_ss1].
    w_cat = jnp.concatenate([params["w_ss0"], params["w_ss1"]], axis=0)  # (2K,5K)

    h_res = pl.pallas_call(
        functools.partial(dlstm_kernel, H=H),
        out_shape=jax.ShapeDtypeStruct((SW, BH, K), jnp.float32),
    )(gates_in, res_cols, w_cat)

    # (SW, B, H, K) -> (B, K, H, SW) -> unskew -> (B, K, H, W)
    h_skewed = jnp.transpose(h_res.reshape(SW, B, H, K), (1, 3, 2, 0))
    return unskew_nchw(h_skewed)


# ----------------------------------------------------------------------------
# Pure-JAX reference (mirrors the PyTorch loop) for a correctness check.
# Uses the explicit loop-based skew so the pad+reshape skew is also verified.
# ----------------------------------------------------------------------------
def _skew_loop(x):
    B, C, H, W = x.shape
    out = jnp.zeros((B, C, H, H + W - 1), x.dtype)
    for r in range(H):
        out = out.at[:, :, r, r:r + W].set(x[:, :, r, :])
    return out


def diagonal_lstm_reference(x, params, hidden_dim):
    B, C, H, W = x.shape
    SW = H + W - 1
    K = hidden_dim
    skewed = _skew_loop(x)
    i_s = (jnp.einsum("bchw,cg->bghw", skewed, params["w_is"])
           + params["b_is"][None, :, None, None])
    h_prev = jnp.zeros((B, K, H), jnp.float32)
    c_prev = jnp.zeros((B, K, H), jnp.float32)
    hs = []
    for i in range(SW):
        h_sh = jnp.concatenate(
            [jnp.zeros((B, K, 1), jnp.float32), h_prev[:, :, :-1]], axis=2)
        s_s = (jnp.einsum("bkh,kg->bgh", h_sh, params["w_ss0"])
               + jnp.einsum("bkh,kg->bgh", h_prev, params["w_ss1"])
               + params["b_ss"][None, :, None])
        gates = i_s[..., i] + s_s
        o, fl, fu, ig, g = [gates[:, j * K:(j + 1) * K] for j in range(5)]
        o, fl, fu, ig = map(jax.nn.sigmoid, (o, fl, fu, ig))
        g = jnp.tanh(g)
        c_sh = jnp.concatenate(
            [jnp.zeros((B, K, 1), jnp.float32), c_prev[:, :, :-1]], axis=2)
        c = fl * c_prev + fu * c_sh + ig * g
        h = o * jnp.tanh(c)
        hs.append(h)
        h_prev, c_prev = h, c
    stacked = jnp.stack(hs, axis=3)                            # (B, K, H, SW)
    unsk = jnp.stack([stacked[:, :, r, r:r + W] for r in range(H)], axis=2)
    residual = (jnp.einsum("bchw,ck->bkhw", x, params["w_res"])
                + params["b_res"][None, :, None, None])
    return unsk + residual


# ----------------------------------------------------------------------------
def init_params(key, in_channels, hidden_dim):
    K = hidden_dim
    ks = jax.random.split(key, 8)
    scale = 0.1
    return {
        "w_is": scale * jax.random.normal(ks[0], (in_channels, 5 * K), jnp.float32),
        "b_is": scale * jax.random.normal(ks[1], (5 * K,), jnp.float32),
        "w_ss0": scale * jax.random.normal(ks[2], (K, 5 * K), jnp.float32),
        "w_ss1": scale * jax.random.normal(ks[3], (K, 5 * K), jnp.float32),
        "b_ss": scale * jax.random.normal(ks[4], (5 * K,), jnp.float32),
        "w_res": scale * jax.random.normal(ks[5], (in_channels, K), jnp.float32),
        "b_res": scale * jax.random.normal(ks[6], (K,), jnp.float32),
    }


if __name__ == "__main__":
    B, C, H, W = 2, 4, 16, 16
    hidden = 32

    key = jax.random.PRNGKey(0)
    kx, kp = jax.random.split(key)
    x = jax.random.normal(kx, (B, C, H, W), jnp.float32)
    params = init_params(kp, C, hidden)

    out = diagonal_lstm_forward(x, params, hidden)
    out = jax.block_until_ready(out)

    ref = jax.block_until_ready(diagonal_lstm_reference(x, params, hidden))
    assert out.shape == (B, hidden, H, W)
    np.testing.assert_allclose(np.asarray(out), np.asarray(ref),
                               rtol=2e-5, atol=2e-5)
    print("KERNEL_OK")
</pallas_src>

<mosaic_0001>
module attributes {stable_mosaic.version = 11 : i64} {
  func.func @pw_matmul_kernel(%arg0: i32, %arg1: memref<992x4xf32, #tpu.memory_space<vmem>>, %arg2: memref<4x192xf32, #tpu.memory_space<vmem>>, %arg3: memref<1x192xf32, #tpu.memory_space<vmem>>, %arg4: memref<992x192xf32, #tpu.memory_space<vmem>>) attributes {dimension_semantics = [#tpu.dimension_semantics<parallel>], iteration_bounds = array<i64: 1>, scalar_prefetch = 0 : i64, scratch_operands = 0 : i64, tpu.core_type = #tpu.core_type<tc>, window_params = [{transform_indices = @transform_0, window_bounds = array<i64: 992, 4>}, {pipeline_mode = #tpu.pipeline_mode<synchronous>, transform_indices = @transform_1, window_bounds = array<i64: 4, 192>}, {pipeline_mode = #tpu.pipeline_mode<synchronous>, transform_indices = @transform_2, window_bounds = array<i64: 1, 192>}, {transform_indices = @transform_3, window_bounds = array<i64: 992, 192>}]} {
    %c0 = arith.constant 0 : index
    %c0_0 = arith.constant 0 : index
    %0 = vector.load %arg1[%c0, %c0_0] : memref<992x4xf32, #tpu.memory_space<vmem>>, vector<992x4xf32>
    %c0_1 = arith.constant 0 : index
    %c0_2 = arith.constant 0 : index
    %1 = vector.load %arg2[%c0_1, %c0_2] : memref<4x192xf32, #tpu.memory_space<vmem>>, vector<4x192xf32>
    %cst = arith.constant dense<0.000000e+00> : vector<992x192xf32>
    %2 = tpu.matmul %0, %1, %cst {dimension_numbers = #tpu.dot_dimension_numbers<[1], [0], [0], [1], [0, 0, 1, 1], [], []>} : vector<992x4xf32>, vector<4x192xf32>, vector<992x192xf32> -> vector<992x192xf32>
    %c0_3 = arith.constant 0 : index
    %c0_4 = arith.constant 0 : index
    %3 = vector.load %arg3[%c0_3, %c0_4] : memref<1x192xf32, #tpu.memory_space<vmem>>, vector<1x192xf32>
    %4 = vector.broadcast %3 : vector<1x192xf32> to vector<992x192xf32>
    %5 = arith.addf %2, %4 : vector<992x192xf32>
    %c0_5 = arith.constant 0 : index
    %c0_6 = arith.constant 0 : index
    %6 = vector.load %arg4[%c0_5, %c0_6] : memref<992x192xf32, #tpu.memory_space<vmem>>, vector<992x192xf32>
    tpu.vector_store %arg4[%c0_5, %c0_6], %5 {strides = array<i32>} : memref<992x192xf32, #tpu.memory_space<vmem>>, vector<992x192xf32>,
    return
  }
  func.func @transform_0(%arg0: i32) -> (i32, i32) {
    %c0_i32 = arith.constant 0 : i32
    %c0_i32_0 = arith.constant 0 : i32
    return %arg0, %c0_i32 : i32, i32
  }
  func.func @transform_1(%arg0: i32) -> (i32, i32) {
    %c0_i32 = arith.constant 0 : i32
    %c0_i32_0 = arith.constant 0 : i32
    %c0_i32_1 = arith.constant 0 : i32
    return %c0_i32, %c0_i32_0 : i32, i32
  }
  func.func @transform_2(%arg0: i32) -> (i32, i32) {
    %c0_i32 = arith.constant 0 : i32
    %c0_i32_0 = arith.constant 0 : i32
    %c0_i32_1 = arith.constant 0 : i32
    return %c0_i32, %c0_i32_0 : i32, i32
  }
  func.func @transform_3(%arg0: i32) -> (i32, i32) {
    %c0_i32 = arith.constant 0 : i32
    %c0_i32_0 = arith.constant 0 : i32
    return %arg0, %c0_i32 : i32, i32
  }
}

</mosaic_0001>

<llo_original>
// kernel: tpu_custom_call.1
$region0: #{tpu_custom_call.1}
  #allocation0 [shape = 'u32[]', space=smem, size = 0x4, offset = 0x4, fixed_abs, tag = 'smem constant byte address 0x4 - core index']
  #allocation1 [shape = 'u32[72,128]{1,0:T(1,128)}', space=vmem, size = 0x9000, scoped, tag = 'internal scratch']
  %s0 = inlined_call_operand.vmem [shape: f32[992,4], index: 0, kind: input, shape index: {}]
  %s1 = inlined_call_operand.vmem [shape: f32[4,192], index: 1, kind: input, shape index: {}]
  %s2 = inlined_call_operand.vmem [shape: f32[1,192], index: 2, kind: input, shape index: {}]
  %s3 = inlined_call_operand.vmem [shape: f32[992,192], index: 3, kind: output, shape index: {}]
  %s4 = sld [smem:[#allocation0]]
  $region22: #{tpu_custom_call.1} parent=0
    _
  %s6 = ssub.s32 1, %s4
  %s7 = scalar_select 0, %s6, %s4
  // Predicated region
  $region2: #{tpu_custom_call.1} parent=0 // pred_check
    _
  $region3: #{tpu_custom_call.1} parent=0 // pred_check_branch
    %9 = sbr.rel (0) target = $region5
  $region4: #{tpu_custom_call.1} parent=0 // pred_region
    _
  $region5: #{tpu_custom_call.1} parent=0 // pred_fallthru
    _
  // Predicated region
  $region6: #{tpu_custom_call.1} parent=0 // pred_check
    _
  $region7: #{tpu_custom_call.1} parent=0 // pred_check_branch
    %11 = sbr.rel (0) target = $region9
  $region8: #{tpu_custom_call.1} parent=0 // pred_region
    _
  $region9: #{tpu_custom_call.1} parent=0 // pred_fallthru
    _
  // Predicated region
  $region10: #{tpu_custom_call.1} parent=0 // pred_check
    _
  $region11: #{tpu_custom_call.1} parent=0 // pred_check_branch
    %13 = sbr.rel (0) target = $region13
  $region12: #{tpu_custom_call.1} parent=0 // pred_region
    _
  $region13: #{tpu_custom_call.1} parent=0 // pred_fallthru
    _
  %v14 = vld [vmem:[%s0] sm:$0xff]
  %v15 = vld [vmem:[%s0 + $0x8] sm:$0xff]
  %v16 = vld [vmem:[%s0 + $0x10] sm:$0xff]
  %v17 = vld [vmem:[%s0 + $0x18] sm:$0xff]
  %v18 = vld [vmem:[%s0 + $0x20] sm:$0xff]
  %v19 = vld [vmem:[%s0 + $0x28] sm:$0xff]
  %v20 = vld [vmem:[%s0 + $0x30] sm:$0xff]
  %v21 = vld [vmem:[%s0 + $0x38] sm:$0xff]
  %v22 = vld [vmem:[%s0 + $0x40] sm:$0xff]
  %v23 = vld [vmem:[%s0 + $0x48] sm:$0xff]
  %v24 = vld [vmem:[%s0 + $0x50] sm:$0xff]
  %v25 = vld [vmem:[%s0 + $0x58] sm:$0xff]
  %v26 = vld [vmem:[%s0 + $0x60] sm:$0xff]
  %v27 = vld [vmem:[%s0 + $0x68] sm:$0xff]
  %v28 = vld [vmem:[%s0 + $0x70] sm:$0xff]
  %v29 = vld [vmem:[%s0 + $0x78] sm:$0xff]
  %v30 = vld [vmem:[%s0 + $0x80] sm:$0xff]
  %v31 = vld [vmem:[%s0 + $0x88] sm:$0xff]
  %v32 = vld [vmem:[%s0 + $0x90] sm:$0xff]
  %v33 = vld [vmem:[%s0 + $0x98] sm:$0xff]
  %v34 = vld [vmem:[%s0 + $0xa0] sm:$0xff]
  %v35 = vld [vmem:[%s0 + $0xa8] sm:$0xff]
  %v36 = vld [vmem:[%s0 + $0xb0] sm:$0xff]
  %v37 = vld [vmem:[%s0 + $0xb8] sm:$0xff]
  %v38 = vld [vmem:[%s0 + $0xc0] sm:$0xff]
  %v39 = vld [vmem:[%s0 + $0xc8] sm:$0xff]
  %v40 = vld [vmem:[%s0 + $0xd0] sm:$0xff]
  %v41 = vld [vmem:[%s0 + $0xd8] sm:$0xff]
  %v42 = vld [vmem:[%s0 + $0xe0] sm:$0xff]
  %v43 = vld [vmem:[%s0 + $0xe8] sm:$0xff]
  %v44 = vld [vmem:[%s0 + $0xf0] sm:$0xff]
  %v45 = vld [vmem:[%s0 + $0xf8] sm:$0xff]
  %v46 = vld [vmem:[%s0 + $0x100] sm:$0xff]
  %v47 = vld [vmem:[%s0 + $0x108] sm:$0xff]
  %v48 = vld [vmem:[%s0 + $0x110] sm:$0xff]
  %v49 = vld [vmem:[%s0 + $0x118] sm:$0xff]
  %v50 = vld [vmem:[%s0 + $0x120] sm:$0xff]
  %v51 = vld [vmem:[%s0 + $0x128] sm:$0xff]
  %v52 = vld [vmem:[%s0 + $0x130] sm:$0xff]
  %v53 = vld [vmem:[%s0 + $0x138] sm:$0xff]
  %v54 = vld [vmem:[%s0 + $0x140] sm:$0xff]
  %v55 = vld [vmem:[%s0 + $0x148] sm:$0xff]
  %v56 = vld [vmem:[%s0 + $0x150] sm:$0xff]
  %v57 = vld [vmem:[%s0 + $0x158] sm:$0xff]
  %v58 = vld [vmem:[%s0 + $0x160] sm:$0xff]
  %v59 = vld [vmem:[%s0 + $0x168] sm:$0xff]
  %v60 = vld [vmem:[%s0 + $0x170] sm:$0xff]
  %v61 = vld [vmem:[%s0 + $0x178] sm:$0xff]
  %v62 = vld [vmem:[%s0 + $0x180] sm:$0xff]
  %v63 = vld [vmem:[%s0 + $0x188] sm:$0xff]
  %v64 = vld [vmem:[%s0 + $0x190] sm:$0xff]
  %v65 = vld [vmem:[%s0 + $0x198] sm:$0xff]
  %v66 = vld [vmem:[%s0 + $0x1a0] sm:$0xff]
  %v67 = vld [vmem:[%s0 + $0x1a8] sm:$0xff]
  %v68 = vld [vmem:[%s0 + $0x1b0] sm:$0xff]
  %v69 = vld [vmem:[%s0 + $0x1b8] sm:$0xff]
  %v70 = vld [vmem:[%s0 + $0x1c0] sm:$0xff]
  %v71 = vld [vmem:[%s0 + $0x1c8] sm:$0xff]
  %v72 = vld [vmem:[%s0 + $0x1d0] sm:$0xff]
  %v73 = vld [vmem:[%s0 + $0x1d8] sm:$0xff]
  %v74 = vld [vmem:[%s0 + $0x1e0] sm:$0xff]
  %v75 = vld [vmem:[%s0 + $0x1e8] sm:$0xff]
  %v76 = vld [vmem:[%s0 + $0x1f0] sm:$0xff]
  %v77 = vld [vmem:[%s0 + $0x1f8] sm:$0xff]
  %v78 = vld [vmem:[%s0 + $0x200] sm:$0xff]
  %v79 = vld [vmem:[%s0 + $0x208] sm:$0xff]
  %v80 = vld [vmem:[%s0 + $0x210] sm:$0xff]
  %v81 = vld [vmem:[%s0 + $0x218] sm:$0xff]
  %v82 = vld [vmem:[%s0 + $0x220] sm:$0xff]
  %v83 = vld [vmem:[%s0 + $0x228] sm:$0xff]
  %v84 = vld [vmem:[%s0 + $0x230] sm:$0xff]
  %v85 = vld [vmem:[%s0 + $0x238] sm:$0xff]
  %v86 = vld [vmem:[%s0 + $0x240] sm:$0xff]
  %v87 = vld [vmem:[%s0 + $0x248] sm:$0xff]
  %v88 = vld [vmem:[%s0 + $0x250] sm:$0xff]
  %v89 = vld [vmem:[%s0 + $0x258] sm:$0xff]
  %v90 = vld [vmem:[%s0 + $0x260] sm:$0xff]
  %v91 = vld [vmem:[%s0 + $0x268] sm:$0xff]
  %v92 = vld [vmem:[%s0 + $0x270] sm:$0xff]
  %v93 = vld [vmem:[%s0 + $0x278] sm:$0xff]
  %v94 = vld [vmem:[%s0 + $0x280] sm:$0xff]
  %v95 = vld [vmem:[%s0 + $0x288] sm:$0xff]
  %v96 = vld [vmem:[%s0 + $0x290] sm:$0xff]
  %v97 = vld [vmem:[%s0 + $0x298] sm:$0xff]
  %v98 = vld [vmem:[%s0 + $0x2a0] sm:$0xff]
  %v99 = vld [vmem:[%s0 + $0x2a8] sm:$0xff]
  %v100 = vld [vmem:[%s0 + $0x2b0] sm:$0xff]
  %v101 = vld [vmem:[%s0 + $0x2b8] sm:$0xff]
  %v102 = vld [vmem:[%s0 + $0x2c0] sm:$0xff]
  %v103 = vld [vmem:[%s0 + $0x2c8] sm:$0xff]
  %v104 = vld [vmem:[%s0 + $0x2d0] sm:$0xff]
  %v105 = vld [vmem:[%s0 + $0x2d8] sm:$0xff]
  %v106 = vld [vmem:[%s0 + $0x2e0] sm:$0xff]
  %v107 = vld [vmem:[%s0 + $0x2e8] sm:$0xff]
  %v108 = vld [vmem:[%s0 + $0x2f0] sm:$0xff]
  %v109 = vld [vmem:[%s0 + $0x2f8] sm:$0xff]
  %v110 = vld [vmem:[%s0 + $0x300] sm:$0xff]
  %v111 = vld [vmem:[%s0 + $0x308] sm:$0xff]
  %v112 = vld [vmem:[%s0 + $0x310] sm:$0xff]
  %v113 = vld [vmem:[%s0 + $0x318] sm:$0xff]
  %v114 = vld [vmem:[%s0 + $0x320] sm:$0xff]
  %v115 = vld [vmem:[%s0 + $0x328] sm:$0xff]
  %v116 = vld [vmem:[%s0 + $0x330] sm:$0xff]
  %v117 = vld [vmem:[%s0 + $0x338] sm:$0xff]
  %v118 = vld [vmem:[%s0 + $0x340] sm:$0xff]
  %v119 = vld [vmem:[%s0 + $0x348] sm:$0xff]
  %v120 = vld [vmem:[%s0 + $0x350] sm:$0xff]
  %v121 = vld [vmem:[%s0 + $0x358] sm:$0xff]
  %v122 = vld [vmem:[%s0 + $0x360] sm:$0xff]
  %v123 = vld [vmem:[%s0 + $0x368] sm:$0xff]
  %v124 = vld [vmem:[%s0 + $0x370] sm:$0xff]
  %v125 = vld [vmem:[%s0 + $0x378] sm:$0xff]
  %v126 = vld [vmem:[%s0 + $0x380] sm:$0xff]
  %v127 = vld [vmem:[%s0 + $0x388] sm:$0xff]
  %v128 = vld [vmem:[%s0 + $0x390] sm:$0xff]
  %v129 = vld [vmem:[%s0 + $0x398] sm:$0xff]
  %v130 = vld [vmem:[%s0 + $0x3a0] sm:$0xff]
  %v131 = vld [vmem:[%s0 + $0x3a8] sm:$0xff]
  %v132 = vld [vmem:[%s0 + $0x3b0] sm:$0xff]
  %v133 = vld [vmem:[%s0 + $0x3b8] sm:$0xff]
  %v134 = vld [vmem:[%s0 + $0x3c0] sm:$0xff]
  %v135 = vld [vmem:[%s0 + $0x3c8] sm:$0xff]
  %v136 = vld [vmem:[%s0 + $0x3d0] sm:$0xff]
  %v137 = vld [vmem:[%s0 + $0x3d8] sm:$0xff]
  %v138 = vld [vmem:[%s1] sm:$0xff]
  %v139 = vld [vmem:[%s2] sm:$0x3]
  %v141 = vperm.slane %v139, 0
  %v142 = vperm.slane %v139, 1
  %146 = vst [vmem:[#allocation1] ss:$2 sm:$0xff] %v138
  %v147 = vld.sshfl [vmem:[#allocation1] sm:$0xff pattern:$0x75316420]
  %v148 = vld.sshfl [vmem:[#allocation1 + $0x8] sm:$0xff pattern:$0x75316420]
  %vm149 = vcmask 31744
  %v151 = vsel %vm149, %v14, 0
  %v154 = vsel %vm149, %v15, 0
  %v157 = vsel %vm149, %v16, 0
  %v160 = vsel %vm149, %v17, 0
  %v163 = vsel %vm149, %v18, 0
  %v166 = vsel %vm149, %v19, 0
  %v169 = vsel %vm149, %v20, 0
  %v172 = vsel %vm149, %v21, 0
  %v175 = vsel %vm149, %v22, 0
  %v178 = vsel %vm149, %v23, 0
  %v181 = vsel %vm149, %v24, 0
  %v184 = vsel %vm149, %v25, 0
  %v187 = vsel %vm149, %v26, 0
  %v190 = vsel %vm149, %v27, 0
  %v193 = vsel %vm149, %v28, 0
  %v196 = vsel %vm149, %v29, 0
  %v199 = vsel %vm149, %v30, 0
  %v202 = vsel %vm149, %v31, 0
  %v205 = vsel %vm149, %v32, 0
  %v208 = vsel %vm149, %v33, 0
  %v211 = vsel %vm149, %v34, 0
  %v214 = vsel %vm149, %v35, 0
  %v217 = vsel %vm149, %v36, 0
  %v220 = vsel %vm149, %v37, 0
  %v223 = vsel %vm149, %v38, 0
  %v226 = vsel %vm149, %v39, 0
  %v229 = vsel %vm149, %v40, 0
  %v232 = vsel %vm149, %v41, 0
  %v235 = vsel %vm149, %v42, 0
  %v238 = vsel %vm149, %v43, 0
  %v241 = vsel %vm149, %v44, 0
  %v244 = vsel %vm149, %v45, 0
  %v247 = vsel %vm149, %v46, 0
  %v250 = vsel %vm149, %v47, 0
  %v253 = vsel %vm149, %v48, 0
  %v256 = vsel %vm149, %v49, 0
  %v259 = vsel %vm149, %v50, 0
  %v262 = vsel %vm149, %v51, 0
  %v265 = vsel %vm149, %v52, 0
  %v268 = vsel %vm149, %v53, 0
  %v271 = vsel %vm149, %v54, 0
  %v274 = vsel %vm149, %v55, 0
  %v277 = vsel %vm149, %v56, 0
  %v280 = vsel %vm149, %v57, 0
  %v283 = vsel %vm149, %v58, 0
  %v286 = vsel %vm149, %v59, 0
  %v289 = vsel %vm149, %v60, 0
  %v292 = vsel %vm149, %v61, 0
  %v295 = vsel %vm149, %v62, 0
  %v298 = vsel %vm149, %v63, 0
  %v301 = vsel %vm149, %v64, 0
  %v304 = vsel %vm149, %v65, 0
  %v307 = vsel %vm149, %v66, 0
  %v310 = vsel %vm149, %v67, 0
  %v313 = vsel %vm149, %v68, 0
  %v316 = vsel %vm149, %v69, 0
  %v319 = vsel %vm149, %v70, 0
  %v322 = vsel %vm149, %v71, 0
  %v325 = vsel %vm149, %v72, 0
  %v328 = vsel %vm149, %v73, 0
  %v331 = vsel %vm149, %v74, 0
  %v334 = vsel %vm149, %v75, 0
  %v337 = vsel %vm149, %v76, 0
  %v340 = vsel %vm149, %v77, 0
  %v343 = vsel %vm149, %v78, 0
  %v346 = vsel %vm149, %v79, 0
  %v349 = vsel %vm149, %v80, 0
  %v352 = vsel %vm149, %v81, 0
  %v355 = vsel %vm149, %v82, 0
  %v358 = vsel %vm149, %v83, 0
  %v361 = vsel %vm149, %v84, 0
  %v364 = vsel %vm149, %v85, 0
  %v367 = vsel %vm149, %v86, 0
  %v370 = vsel %vm149, %v87, 0
  %v373 = vsel %vm149, %v88, 0
  %v376 = vsel %vm149, %v89, 0
  %v379 = vsel %vm149, %v90, 0
  %v382 = vsel %vm149, %v91, 0
  %v385 = vsel %vm149, %v92, 0
  %v388 = vsel %vm149, %v93, 0
  %v391 = vsel %vm149, %v94, 0
  %v394 = vsel %vm149, %v95, 0
  %v397 = vsel %vm149, %v96, 0
  %v400 = vsel %vm149, %v97, 0
  %v403 = vsel %vm149, %v98, 0
  %v406 = vsel %vm149, %v99, 0
  %v409 = vsel %vm149, %v100, 0
  %v412 = vsel %vm149, %v101, 0
  %v415 = vsel %vm149, %v102, 0
  %v418 = vsel %vm149, %v103, 0
  %v421 = vsel %vm149, %v104, 0
  %v424 = vsel %vm149, %v105, 0
  %v427 = vsel %vm149, %v106, 0
  %v430 = vsel %vm149, %v107, 0
  %v433 = vsel %vm149, %v108, 0
  %v436 = vsel %vm149, %v109, 0
  %v439 = vsel %vm149, %v110, 0
  %v442 = vsel %vm149, %v111, 0
  %v445 = vsel %vm149, %v112, 0
  %v448 = vsel %vm149, %v113, 0
  %v451 = vsel %vm149, %v114, 0
  %v454 = vsel %vm149, %v115, 0
  %v457 = vsel %vm149, %v116, 0
  %v460 = vsel %vm149, %v117, 0
  %v463 = vsel %vm149, %v118, 0
  %v466 = vsel %vm149, %v119, 0
  %v469 = vsel %vm149, %v120, 0
  %v472 = vsel %vm149, %v121, 0
  %v475 = vsel %vm149, %v122, 0
  %v478 = vsel %vm149, %v123, 0
  %v481 = vsel %vm149, %v124, 0
  %v484 = vsel %vm149, %v125, 0
  %v487 = vsel %vm149, %v126, 0
  %v490 = vsel %vm149, %v127, 0
  %v493 = vsel %vm149, %v128, 0
  %v496 = vsel %vm149, %v129, 0
  %v499 = vsel %vm149, %v130, 0
  %v502 = vsel %vm149, %v131, 0
  %v505 = vsel %vm149, %v132, 0
  %v508 = vsel %vm149, %v133, 0
  %v511 = vsel %vm149, %v134, 0
  %v514 = vsel %vm149, %v135, 0
  %v517 = vsel %vm149, %v136, 0
  %v520 = vsel %vm149, %v137, 0
  %vm522 = vcmask 1043456
  %v523 = vsel %vm522, %v147, 0
  %v525 = vsel %vm522, %v148, 0
  %527 = vmatpush.msra.mxu0 0.0
  %528 = vmatpush.msra.mxu0 0.0
  %529 = vmatpush.msra.mxu0 0.0
  %530 = vmatpush.msra.mxu0 0.0
  %531 = vmatpush.msra.mxu0 0.0
  %532 = vmatpush.msra.mxu0 0.0
  %533 = vmatpush.msra.mxu0 0.0
  %534 = vmatpush.msra.mxu0 0.0
  %535 = vmatpush.msra.mxu0 0.0
  %536 = vmatpush.msra.mxu0 0.0
  %537 = vmatpush.msra.mxu0 0.0
  %538 = vmatpush.msra.mxu0 0.0
  %539 = vmatpush.msra.mxu0 0.0
  %540 = vmatpush.msra.mxu0 0.0
  %541 = vmatpush.msra.mxu0 0.0
  %542 = vmatpush.msra.mxu0 %v523
  %543 = vmatmul.f32.gmra.mxu0 %v151
  %v544 = vpop.f32.mrf.mxu0
  %v545 = vadd.f32 %v141, %v544
  %546 = vmatmul.f32.gmra.mxu0 %v154
  %v547 = vpop.f32.mrf.mxu0
  %v548 = vadd.f32 %v141, %v547
  %549 = vmatmul.f32.gmra.mxu0 %v157
  %v550 = vpop.f32.mrf.mxu0
  %v551 = vadd.f32 %v141, %v550
  %552 = vmatmul.f32.gmra.mxu0 %v160
  %v553 = vpop.f32.mrf.mxu0
  %v554 = vadd.f32 %v141, %v553
  %555 = vmatmul.f32.gmra.mxu0 %v163
  %v556 = vpop.f32.mrf.mxu0
  %v557 = vadd.f32 %v141, %v556
  %558 = vmatmul.f32.gmra.mxu0 %v166
  %v559 = vpop.f32.mrf.mxu0
  %v560 = vadd.f32 %v141, %v559
  %561 = vmatmul.f32.gmra.mxu0 %v169
  %v562 = vpop.f32.mrf.mxu0
  %v563 = vadd.f32 %v141, %v562
  %564 = vmatmul.f32.gmra.mxu0 %v172
  %v565 = vpop.f32.mrf.mxu0
  %v566 = vadd.f32 %v141, %v565
  %567 = vmatmul.f32.gmra.mxu0 %v175
  %v568 = vpop.f32.mrf.mxu0
  %v569 = vadd.f32 %v141, %v568
  %570 = vmatmul.f32.gmra.mxu0 %v178
  %v571 = vpop.f32.mrf.mxu0
  %v572 = vadd.f32 %v141, %v571
  %573 = vmatmul.f32.gmra.mxu0 %v181
  %v574 = vpop.f32.mrf.mxu0
  %v575 = vadd.f32 %v141, %v574
  %576 = vmatmul.f32.gmra.mxu0 %v184
  %v577 = vpop.f32.mrf.mxu0
  %v578 = vadd.f32 %v141, %v577
  %579 = vmatmul.f32.gmra.mxu0 %v187
  %v580 = vpop.f32.mrf.mxu0
  %v581 = vadd.f32 %v141, %v580
  %582 = vmatmul.f32.gmra.mxu0 %v190
  %v583 = vpop.f32.mrf.mxu0
  %v584 = vadd.f32 %v141, %v583
  %585 = vmatmul.f32.gmra.mxu0 %v193
  %v586 = vpop.f32.mrf.mxu0
  %v587 = vadd.f32 %v141, %v586
  %588 = vmatmul.f32.gmra.mxu0 %v196
  %v589 = vpop.f32.mrf.mxu0
  %v590 = vadd.f32 %v141, %v589
  %591 = vmatmul.f32.gmra.mxu0 %v199
  %v592 = vpop.f32.mrf.mxu0
  %v593 = vadd.f32 %v141, %v592
  %594 = vmatmul.f32.gmra.mxu0 %v202
  %v595 = vpop.f32.mrf.mxu0
  %v596 = vadd.f32 %v141, %v595
  %597 = vmatmul.f32.gmra.mxu0 %v205
  %v598 = vpop.f32.mrf.mxu0
  %v599 = vadd.f32 %v141, %v598
  %600 = vmatmul.f32.gmra.mxu0 %v208
  %v601 = vpop.f32.mrf.mxu0
  %v602 = vadd.f32 %v141, %v601
  %603 = vmatmul.f32.gmra.mxu0 %v211
  %v604 = vpop.f32.mrf.mxu0
  %v605 = vadd.f32 %v141, %v604
  %606 = vmatmul.f32.gmra.mxu0 %v214
  %v607 = vpop.f32.mrf.mxu0
  %v608 = vadd.f32 %v141, %v607
  %609 = vmatmul.f32.gmra.mxu0 %v217
  %v610 = vpop.f32.mrf.mxu0
  %v611 = vadd.f32 %v141, %v610
  %612 = vmatmul.f32.gmra.mxu0 %v220
  %v613 = vpop.f32.mrf.mxu0
  %v614 = vadd.f32 %v141, %v613
  %615 = vmatmul.f32.gmra.mxu0 %v223
  %v616 = vpop.f32.mrf.mxu0
  %v617 = vadd.f32 %v141, %v616
  %618 = vmatmul.f32.gmra.mxu0 %v226
  %v619 = vpop.f32.mrf.mxu0
  %v620 = vadd.f32 %v141, %v619
  %621 = vmatmul.f32.gmra.mxu0 %v229
  %v622 = vpop.f32.mrf.mxu0
  %v623 = vadd.f32 %v141, %v622
  %624 = vmatmul.f32.gmra.mxu0 %v232
  %v625 = vpop.f32.mrf.mxu0
  %v626 = vadd.f32 %v141, %v625
  %627 = vmatmul.f32.gmra.mxu0 %v235
  %v628 = vpop.f32.mrf.mxu0
  %v629 = vadd.f32 %v141, %v628
  %630 = vmatmul.f32.gmra.mxu0 %v238
  %v631 = vpop.f32.mrf.mxu0
  %v632 = vadd.f32 %v141, %v631
  %633 = vmatmul.f32.gmra.mxu0 %v241
  %v634 = vpop.f32.mrf.mxu0
  %v635 = vadd.f32 %v141, %v634
  %636 = vmatmul.f32.gmra.mxu0 %v244
  %v637 = vpop.f32.mrf.mxu0
  %v638 = vadd.f32 %v141, %v637
  %639 = vmatmul.f32.gmra.mxu0 %v247
  %v640 = vpop.f32.mrf.mxu0
  %v641 = vadd.f32 %v141, %v640
  %642 = vmatmul.f32.gmra.mxu0 %v250
  %v643 = vpop.f32.mrf.mxu0
  %v644 = vadd.f32 %v141, %v643
  %645 = vmatmul.f32.gmra.mxu0 %v253
  %v646 = vpop.f32.mrf.mxu0
  %v647 = vadd.f32 %v141, %v646
  %648 = vmatmul.f32.gmra.mxu0 %v256
  %v649 = vpop.f32.mrf.mxu0
  %v650 = vadd.f32 %v141, %v649
  %651 = vmatmul.f32.gmra.mxu0 %v259
  %v652 = vpop.f32.mrf.mxu0
  %v653 = vadd.f32 %v141, %v652
  %654 = vmatmul.f32.gmra.mxu0 %v262
  %v655 = vpop.f32.mrf.mxu0
  %v656 = vadd.f32 %v141, %v655
  %657 = vmatmul.f32.gmra.mxu0 %v265
  %v658 = vpop.f32.mrf.mxu0
  %v659 = vadd.f32 %v141, %v658
  %660 = vmatmul.f32.gmra.mxu0 %v268
  %v661 = vpop.f32.mrf.mxu0
  %v662 = vadd.f32 %v141, %v661
  %663 = vmatmul.f32.gmra.mxu0 %v271
  %v664 = vpop.f32.mrf.mxu0
  %v665 = vadd.f32 %v141, %v664
  %666 = vmatmul.f32.gmra.mxu0 %v274
  %v667 = vpop.f32.mrf.mxu0
  %v668 = vadd.f32 %v141, %v667
  %669 = vmatmul.f32.gmra.mxu0 %v277
  %v670 = vpop.f32.mrf.mxu0
  %v671 = vadd.f32 %v141, %v670
  %672 = vmatmul.f32.gmra.mxu0 %v280
  %v673 = vpop.f32.mrf.mxu0
  %v674 = vadd.f32 %v141, %v673
  %675 = vmatmul.f32.gmra.mxu0 %v283
  %v676 = vpop.f32.mrf.mxu0
  %v677 = vadd.f32 %v141, %v676
  %678 = vmatmul.f32.gmra.mxu0 %v286
  %v679 = vpop.f32.mrf.mxu0
  %v680 = vadd.f32 %v141, %v679
  %681 = vmatmul.f32.gmra.mxu0 %v289
  %v682 = vpop.f32.mrf.mxu0
  %v683 = vadd.f32 %v141, %v682
  %684 = vmatmul.f32.gmra.mxu0 %v292
  %v685 = vpop.f32.mrf.mxu0
  %v686 = vadd.f32 %v141, %v685
  %687 = vmatmul.f32.gmra.mxu0 %v295
  %v688 = vpop.f32.mrf.mxu0
  %v689 = vadd.f32 %v141, %v688
  %690 = vmatmul.f32.gmra.mxu0 %v298
  %v691 = vpop.f32.mrf.mxu0
  %v692 = vadd.f32 %v141, %v691
  %693 = vmatmul.f32.gmra.mxu0 %v301
  %v694 = vpop.f32.mrf.mxu0
  %v695 = vadd.f32 %v141, %v694
  %696 = vmatmul.f32.gmra.mxu0 %v304
  %v697 = vpop.f32.mrf.mxu0
  %v698 = vadd.f32 %v141, %v697
  %699 = vmatmul.f32.gmra.mxu0 %v307
  %v700 = vpop.f32.mrf.mxu0
  %v701 = vadd.f32 %v141, %v700
  %702 = vmatmul.f32.gmra.mxu0 %v310
  %v703 = vpop.f32.mrf.mxu0
  %v704 = vadd.f32 %v141, %v703
  %705 = vmatmul.f32.gmra.mxu0 %v313
  %v706 = vpop.f32.mrf.mxu0
  %v707 = vadd.f32 %v141, %v706
  %708 = vmatmul.f32.gmra.mxu0 %v316
  %v709 = vpop.f32.mrf.mxu0
  %v710 = vadd.f32 %v141, %v709
  %711 = vmatmul.f32.gmra.mxu0 %v319
  %v712 = vpop.f32.mrf.mxu0
  %v713 = vadd.f32 %v141, %v712
  %714 = vmatmul.f32.gmra.mxu0 %v322
  %v715 = vpop.f32.mrf.mxu0
  %v716 = vadd.f32 %v141, %v715
  %717 = vmatmul.f32.gmra.mxu0 %v325
  %v718 = vpop.f32.mrf.mxu0
  %v719 = vadd.f32 %v141, %v718
  %720 = vmatmul.f32.gmra.mxu0 %v328
  %v721 = vpop.f32.mrf.mxu0
  %v722 = vadd.f32 %v141, %v721
  %723 = vmatmul.f32.gmra.mxu0 %v331
  %v724 = vpop.f32.mrf.mxu0
  %v725 = vadd.f32 %v141, %v724
  %726 = vmatmul.f32.gmra.mxu0 %v334
  %v727 = vpop.f32.mrf.mxu0
  %v728 = vadd.f32 %v141, %v727
  %729 = vmatmul.f32.gmra.mxu0 %v337
  %v730 = vpop.f32.mrf.mxu0
  %v731 = vadd.f32 %v141, %v730
  %732 = vmatmul.f32.gmra.mxu0 %v340
  %v733 = vpop.f32.mrf.mxu0
  %v734 = vadd.f32 %v141, %v733
  %735 = vmatmul.f32.gmra.mxu0 %v343
  %v736 = vpop.f32.mrf.mxu0
  %v737 = vadd.f32 %v141, %v736
  %738 = vmatmul.f32.gmra.mxu0 %v346
  %v739 = vpop.f32.mrf.mxu0
  %v740 = vadd.f32 %v141, %v739
  %741 = vmatmul.f32.gmra.mxu0 %v349
  %v742 = vpop.f32.mrf.mxu0
  %v743 = vadd.f32 %v141, %v742
  %744 = vmatmul.f32.gmra.mxu0 %v352
  %v745 = vpop.f32.mrf.mxu0
  %v746 = vadd.f32 %v141, %v745
  %747 = vmatmul.f32.gmra.mxu0 %v355
  %v748 = vpop.f32.mrf.mxu0
  %v749 = vadd.f32 %v141, %v748
  %750 = vmatmul.f32.gmra.mxu0 %v358
  %v751 = vpop.f32.mrf.mxu0
  %v752 = vadd.f32 %v141, %v751
  %753 = vmatmul.f32.gmra.mxu0 %v361
  %v754 = vpop.f32.mrf.mxu0
  %v755 = vadd.f32 %v141, %v754
  %756 = vmatmul.f32.gmra.mxu0 %v364
  %v757 = vpop.f32.mrf.mxu0
  %v758 = vadd.f32 %v141, %v757
  %759 = vmatmul.f32.gmra.mxu0 %v367
  %v760 = vpop.f32.mrf.mxu0
  %v761 = vadd.f32 %v141, %v760
  %762 = vmatmul.f32.gmra.mxu0 %v370
  %v763 = vpop.f32.mrf.mxu0
  %v764 = vadd.f32 %v141, %v763
  %765 = vmatmul.f32.gmra.mxu0 %v373
  %v766 = vpop.f32.mrf.mxu0
  %v767 = vadd.f32 %v141, %v766
  %768 = vmatmul.f32.gmra.mxu0 %v376
  %v769 = vpop.f32.mrf.mxu0
  %v770 = vadd.f32 %v141, %v769
  %771 = vmatmul.f32.gmra.mxu0 %v379
  %v772 = vpop.f32.mrf.mxu0
  %v773 = vadd.f32 %v141, %v772
  %774 = vmatmul.f32.gmra.mxu0 %v382
  %v775 = vpop.f32.mrf.mxu0
  %v776 = vadd.f32 %v141, %v775
  %777 = vmatmul.f32.gmra.mxu0 %v385
  %v778 = vpop.f32.mrf.mxu0
  %v779 = vadd.f32 %v141, %v778
  %780 = vmatmul.f32.gmra.mxu0 %v388
  %v781 = vpop.f32.mrf.mxu0
  %v782 = vadd.f32 %v141, %v781
  %783 = vmatmul.f32.gmra.mxu0 %v391
  %v784 = vpop.f32.mrf.mxu0
  %v785 = vadd.f32 %v141, %v784
  %786 = vmatmul.f32.gmra.mxu0 %v394
  %v787 = vpop.f32.mrf.mxu0
  %v788 = vadd.f32 %v141, %v787
  %789 = vmatmul.f32.gmra.mxu0 %v397
  %v790 = vpop.f32.mrf.mxu0
  %v791 = vadd.f32 %v141, %v790
  %792 = vmatmul.f32.gmra.mxu0 %v400
  %v793 = vpop.f32.mrf.mxu0
  %v794 = vadd.f32 %v141, %v793
  %795 = vmatmul.f32.gmra.mxu0 %v403
  %v796 = vpop.f32.mrf.mxu0
  %v797 = vadd.f32 %v141, %v796
  %798 = vmatmul.f32.gmra.mxu0 %v406
  %v799 = vpop.f32.mrf.mxu0
  %v800 = vadd.f32 %v141, %v799
  %801 = vmatmul.f32.gmra.mxu0 %v409
  %v802 = vpop.f32.mrf.mxu0
  %v803 = vadd.f32 %v141, %v802
  %804 = vmatmul.f32.gmra.mxu0 %v412
  %v805 = vpop.f32.mrf.mxu0
  %v806 = vadd.f32 %v141, %v805
  %807 = vmatmul.f32.gmra.mxu0 %v415
  %v808 = vpop.f32.mrf.mxu0
  %v809 = vadd.f32 %v141, %v808
  %810 = vmatmul.f32.gmra.mxu0 %v418
  %v811 = vpop.f32.mrf.mxu0
  %v812 = vadd.f32 %v141, %v811
  %813 = vmatmul.f32.gmra.mxu0 %v421
  %v814 = vpop.f32.mrf.mxu0
  %v815 = vadd.f32 %v141, %v814
  %816 = vmatmul.f32.gmra.mxu0 %v424
  %v817 = vpop.f32.mrf.mxu0
  %v818 = vadd.f32 %v141, %v817
  %819 = vmatmul.f32.gmra.mxu0 %v427
  %v820 = vpop.f32.mrf.mxu0
  %v821 = vadd.f32 %v141, %v820
  %822 = vmatmul.f32.gmra.mxu0 %v430
  %v823 = vpop.f32.mrf.mxu0
  %v824 = vadd.f32 %v141, %v823
  %825 = vmatmul.f32.gmra.mxu0 %v433
  %v826 = vpop.f32.mrf.mxu0
  %v827 = vadd.f32 %v141, %v826
  %828 = vmatmul.f32.gmra.mxu0 %v436
  %v829 = vpop.f32.mrf.mxu0
  %v830 = vadd.f32 %v141, %v829
  %831 = vmatmul.f32.gmra.mxu0 %v439
  %v832 = vpop.f32.mrf.mxu0
  %v833 = vadd.f32 %v141, %v832
  %834 = vmatmul.f32.gmra.mxu0 %v442
  %v835 = vpop.f32.mrf.mxu0
  %v836 = vadd.f32 %v141, %v835
  %837 = vmatmul.f32.gmra.mxu0 %v445
  %v838 = vpop.f32.mrf.mxu0
  %v839 = vadd.f32 %v141, %v838
  %840 = vmatmul.f32.gmra.mxu0 %v448
  %v841 = vpop.f32.mrf.mxu0
  %v842 = vadd.f32 %v141, %v841
  %843 = vmatmul.f32.gmra.mxu0 %v451
  %v844 = vpop.f32.mrf.mxu0
  %v845 = vadd.f32 %v141, %v844
  %846 = vmatmul.f32.gmra.mxu0 %v454
  %v847 = vpop.f32.mrf.mxu0
  %v848 = vadd.f32 %v141, %v847
  %849 = vmatmul.f32.gmra.mxu0 %v457
  %v850 = vpop.f32.mrf.mxu0
  %v851 = vadd.f32 %v141, %v850
  %852 = vmatmul.f32.gmra.mxu0 %v460
  %v853 = vpop.f32.mrf.mxu0
  %v854 = vadd.f32 %v141, %v853
  %855 = vmatmul.f32.gmra.mxu0 %v463
  %v856 = vpop.f32.mrf.mxu0
  %v857 = vadd.f32 %v141, %v856
  %858 = vmatmul.f32.gmra.mxu0 %v466
  %v859 = vpop.f32.mrf.mxu0
  %v860 = vadd.f32 %v141, %v859
  %861 = vmatmul.f32.gmra.mxu0 %v469
  %v862 = vpop.f32.mrf.mxu0
  %v863 = vadd.f32 %v141, %v862
  %864 = vmatmul.f32.gmra.mxu0 %v472
  %v865 = vpop.f32.mrf.mxu0
  %v866 = vadd.f32 %v141, %v865
  %867 = vmatmul.f32.gmra.mxu0 %v475
  %v868 = vpop.f32.mrf.mxu0
  %v869 = vadd.f32 %v141, %v868
  %870 = vmatmul.f32.gmra.mxu0 %v478
  %v871 = vpop.f32.mrf.mxu0
  %v872 = vadd.f32 %v141, %v871
  %873 = vmatmul.f32.gmra.mxu0 %v481
  %v874 = vpop.f32.mrf.mxu0
  %v875 = vadd.f32 %v141, %v874
  %876 = vmatmul.f32.gmra.mxu0 %v484
  %v877 = vpop.f32.mrf.mxu0
  %v878 = vadd.f32 %v141, %v877
  %879 = vmatmul.f32.gmra.mxu0 %v487
  %v880 = vpop.f32.mrf.mxu0
  %v881 = vadd.f32 %v141, %v880
  %882 = vmatmul.f32.gmra.mxu0 %v490
  %v883 = vpop.f32.mrf.mxu0
  %v884 = vadd.f32 %v141, %v883
  %885 = vmatmul.f32.gmra.mxu0 %v493
  %v886 = vpop.f32.mrf.mxu0
  %v887 = vadd.f32 %v141, %v886
  %888 = vmatmul.f32.gmra.mxu0 %v496
  %v889 = vpop.f32.mrf.mxu0
  %v890 = vadd.f32 %v141, %v889
  %891 = vmatmul.f32.gmra.mxu0 %v499
  %v892 = vpop.f32.mrf.mxu0
  %v893 = vadd.f32 %v141, %v892
  %894 = vmatmul.f32.gmra.mxu0 %v502
  %v895 = vpop.f32.mrf.mxu0
  %v896 = vadd.f32 %v141, %v895
  %897 = vmatmul.f32.gmra.mxu0 %v505
  %v898 = vpop.f32.mrf.mxu0
  %v899 = vadd.f32 %v141, %v898
  %900 = vmatmul.f32.gmra.mxu0 %v508
  %v901 = vpop.f32.mrf.mxu0
  %v902 = vadd.f32 %v141, %v901
  %903 = vmatmul.f32.gmra.mxu0 %v511
  %v904 = vpop.f32.mrf.mxu0
  %v905 = vadd.f32 %v141, %v904
  %906 = vmatmul.f32.gmra.mxu0 %v514
  %v907 = vpop.f32.mrf.mxu0
  %v908 = vadd.f32 %v141, %v907
  %909 = vmatmul.f32.gmra.mxu0 %v517
  %v910 = vpop.f32.mrf.mxu0
  %v911 = vadd.f32 %v141, %v910
  %912 = vmatmul.f32.gmra.mxu0 %v520
  %v913 = vpop.f32.mrf.mxu0
  %v914 = vadd.f32 %v141, %v913
  %915 = vdwg.mxu0
  %916 = vmatpush.msra.mxu0 0.0
  %917 = vmatpush.msra.mxu0 0.0
  %918 = vmatpush.msra.mxu0 0.0
  %919 = vmatpush.msra.mxu0 0.0
  %920 = vmatpush.msra.mxu0 0.0
  %921 = vmatpush.msra.mxu0 0.0
  %922 = vmatpush.msra.mxu0 0.0
  %923 = vmatpush.msra.mxu0 0.0
  %924 = vmatpush.msra.mxu0 0.0
  %925 = vmatpush.msra.mxu0 0.0
  %926 = vmatpush.msra.mxu0 0.0
  %927 = vmatpush.msra.mxu0 0.0
  %928 = vmatpush.msra.mxu0 0.0
  %929 = vmatpush.msra.mxu0 0.0
  %930 = vmatpush.msra.mxu0 0.0
  %931 = vmatpush.msra.mxu0 %v525
  %932 = vmatmul.f32.gmra.mxu0 %v151
  %v933 = vpop.f32.mrf.mxu0
  %v934 = vadd.f32 %v142, %v933
  %935 = vmatmul.f32.gmra.mxu0 %v154
  %v936 = vpop.f32.mrf.mxu0
  %v937 = vadd.f32 %v142, %v936
  %938 = vmatmul.f32.gmra.mxu0 %v157
  %v939 = vpop.f32.mrf.mxu0
  %v940 = vadd.f32 %v142, %v939
  %941 = vmatmul.f32.gmra.mxu0 %v160
  %v942 = vpop.f32.mrf.mxu0
  %v943 = vadd.f32 %v142, %v942
  %944 = vmatmul.f32.gmra.mxu0 %v163
  %v945 = vpop.f32.mrf.mxu0
  %v946 = vadd.f32 %v142, %v945
  %947 = vmatmul.f32.gmra.mxu0 %v166
  %v948 = vpop.f32.mrf.mxu0
  %v949 = vadd.f32 %v142, %v948
  %950 = vmatmul.f32.gmra.mxu0 %v169
  %v951 = vpop.f32.mrf.mxu0
  %v952 = vadd.f32 %v142, %v951
  %953 = vmatmul.f32.gmra.mxu0 %v172
  %v954 = vpop.f32.mrf.mxu0
  %v955 = vadd.f32 %v142, %v954
  %956 = vmatmul.f32.gmra.mxu0 %v175
  %v957 = vpop.f32.mrf.mxu0
  %v958 = vadd.f32 %v142, %v957
  %959 = vmatmul.f32.gmra.mxu0 %v178
  %v960 = vpop.f32.mrf.mxu0
  %v961 = vadd.f32 %v142, %v960
  %962 = vmatmul.f32.gmra.mxu0 %v181
  %v963 = vpop.f32.mrf.mxu0
  %v964 = vadd.f32 %v142, %v963
  %965 = vmatmul.f32.gmra.mxu0 %v184
  %v966 = vpop.f32.mrf.mxu0
  %v967 = vadd.f32 %v142, %v966
  %968 = vmatmul.f32.gmra.mxu0 %v187
  %v969 = vpop.f32.mrf.mxu0
  %v970 = vadd.f32 %v142, %v969
  %971 = vmatmul.f32.gmra.mxu0 %v190
  %v972 = vpop.f32.mrf.mxu0
  %v973 = vadd.f32 %v142, %v972
  %974 = vmatmul.f32.gmra.mxu0 %v193
  %v975 = vpop.f32.mrf.mxu0
  %v976 = vadd.f32 %v142, %v975
  %977 = vmatmul.f32.gmra.mxu0 %v196
  %v978 = vpop.f32.mrf.mxu0
  %v979 = vadd.f32 %v142, %v978
  %980 = vmatmul.f32.gmra.mxu0 %v199
  %v981 = vpop.f32.mrf.mxu0
  %v982 = vadd.f32 %v142, %v981
  %983 = vmatmul.f32.gmra.mxu0 %v202
  %v984 = vpop.f32.mrf.mxu0
  %v985 = vadd.f32 %v142, %v984
  %986 = vmatmul.f32.gmra.mxu0 %v205
  %v987 = vpop.f32.mrf.mxu0
  %v988 = vadd.f32 %v142, %v987
  %989 = vmatmul.f32.gmra.mxu0 %v208
  %v990 = vpop.f32.mrf.mxu0
  %v991 = vadd.f32 %v142, %v990
  %992 = vmatmul.f32.gmra.mxu0 %v211
  %v993 = vpop.f32.mrf.mxu0
  %v994 = vadd.f32 %v142, %v993
  %995 = vmatmul.f32.gmra.mxu0 %v214
  %v996 = vpop.f32.mrf.mxu0
  %v997 = vadd.f32 %v142, %v996
  %998 = vmatmul.f32.gmra.mxu0 %v217
  %v999 = vpop.f32.mrf.mxu0
  %v1000 = vadd.f32 %v142, %v999
  %1001 = vmatmul.f32.gmra.mxu0 %v220
  %v1002 = vpop.f32.mrf.mxu0
  %v1003 = vadd.f32 %v142, %v1002
  %1004 = vmatmul.f32.gmra.mxu0 %v223
  %v1005 = vpop.f32.mrf.mxu0
  %v1006 = vadd.f32 %v142, %v1005
  %1007 = vmatmul.f32.gmra.mxu0 %v226
  %v1008 = vpop.f32.mrf.mxu0
  %v1009 = vadd.f32 %v142, %v1008
  %1010 = vmatmul.f32.gmra.mxu0 %v229
  %v1011 = vpop.f32.mrf.mxu0
  %v1012 = vadd.f32 %v142, %v1011
  %1013 = vmatmul.f32.gmra.mxu0 %v232
  %v1014 = vpop.f32.mrf.mxu0
  %v1015 = vadd.f32 %v142, %v1014
  %1016 = vmatmul.f32.gmra.mxu0 %v235
  %v1017 = vpop.f32.mrf.mxu0
  %v1018 = vadd.f32 %v142, %v1017
  %1019 = vmatmul.f32.gmra.mxu0 %v238
  %v1020 = vpop.f32.mrf.mxu0
  %v1021 = vadd.f32 %v142, %v1020
  %1022 = vmatmul.f32.gmra.mxu0 %v241
  %v1023 = vpop.f32.mrf.mxu0
  %v1024 = vadd.f32 %v142, %v1023
  %1025 = vmatmul.f32.gmra.mxu0 %v244
  %v1026 = vpop.f32.mrf.mxu0
  %v1027 = vadd.f32 %v142, %v1026
  %1028 = vmatmul.f32.gmra.mxu0 %v247
  %v1029 = vpop.f32.mrf.mxu0
  %v1030 = vadd.f32 %v142, %v1029
  %1031 = vmatmul.f32.gmra.mxu0 %v250
  %v1032 = vpop.f32.mrf.mxu0
  %v1033 = vadd.f32 %v142, %v1032
  %1034 = vmatmul.f32.gmra.mxu0 %v253
  %v1035 = vpop.f32.mrf.mxu0
  %v1036 = vadd.f32 %v142, %v1035
  %1037 = vmatmul.f32.gmra.mxu0 %v256
  %v1038 = vpop.f32.mrf.mxu0
  %v1039 = vadd.f32 %v142, %v1038
  %1040 = vmatmul.f32.gmra.mxu0 %v259
  %v1041 = vpop.f32.mrf.mxu0
  %v1042 = vadd.f32 %v142, %v1041
  %1043 = vmatmul.f32.gmra.mxu0 %v262
  %v1044 = vpop.f32.mrf.mxu0
  %v1045 = vadd.f32 %v142, %v1044
  %1046 = vmatmul.f32.gmra.mxu0 %v265
  %v1047 = vpop.f32.mrf.mxu0
  %v1048 = vadd.f32 %v142, %v1047
  %1049 = vmatmul.f32.gmra.mxu0 %v268
  %v1050 = vpop.f32.mrf.mxu0
  %v1051 = vadd.f32 %v142, %v1050
  %1052 = vmatmul.f32.gmra.mxu0 %v271
  %v1053 = vpop.f32.mrf.mxu0
  %v1054 = vadd.f32 %v142, %v1053
  %1055 = vmatmul.f32.gmra.mxu0 %v274
  %v1056 = vpop.f32.mrf.mxu0
  %v1057 = vadd.f32 %v142, %v1056
  %1058 = vmatmul.f32.gmra.mxu0 %v277
  %v1059 = vpop.f32.mrf.mxu0
  %v1060 = vadd.f32 %v142, %v1059
  %1061 = vmatmul.f32.gmra.mxu0 %v280
  %v1062 = vpop.f32.mrf.mxu0
  %v1063 = vadd.f32 %v142, %v1062
  %1064 = vmatmul.f32.gmra.mxu0 %v283
  %v1065 = vpop.f32.mrf.mxu0
  %v1066 = vadd.f32 %v142, %v1065
  %1067 = vmatmul.f32.gmra.mxu0 %v286
  %v1068 = vpop.f32.mrf.mxu0
  %v1069 = vadd.f32 %v142, %v1068
  %1070 = vmatmul.f32.gmra.mxu0 %v289
  %v1071 = vpop.f32.mrf.mxu0
  %v1072 = vadd.f32 %v142, %v1071
  %1073 = vmatmul.f32.gmra.mxu0 %v292
  %v1074 = vpop.f32.mrf.mxu0
  %v1075 = vadd.f32 %v142, %v1074
  %1076 = vmatmul.f32.gmra.mxu0 %v295
  %v1077 = vpop.f32.mrf.mxu0
  %v1078 = vadd.f32 %v142, %v1077
  %1079 = vmatmul.f32.gmra.mxu0 %v298
  %v1080 = vpop.f32.mrf.mxu0
  %v1081 = vadd.f32 %v142, %v1080
  %1082 = vmatmul.f32.gmra.mxu0 %v301
  %v1083 = vpop.f32.mrf.mxu0
  %v1084 = vadd.f32 %v142, %v1083
  %1085 = vmatmul.f32.gmra.mxu0 %v304
  %v1086 = vpop.f32.mrf.mxu0
  %v1087 = vadd.f32 %v142, %v1086
  %1088 = vmatmul.f32.gmra.mxu0 %v307
  %v1089 = vpop.f32.mrf.mxu0
  %v1090 = vadd.f32 %v142, %v1089
  %1091 = vmatmul.f32.gmra.mxu0 %v310
  %v1092 = vpop.f32.mrf.mxu0
  %v1093 = vadd.f32 %v142, %v1092
  %1094 = vmatmul.f32.gmra.mxu0 %v313
  %v1095 = vpop.f32.mrf.mxu0
  %v1096 = vadd.f32 %v142, %v1095
  %1097 = vmatmul.f32.gmra.mxu0 %v316
  %v1098 = vpop.f32.mrf.mxu0
  %v1099 = vadd.f32 %v142, %v1098
  %1100 = vmatmul.f32.gmra.mxu0 %v319
  %v1101 = vpop.f32.mrf.mxu0
  %v1102 = vadd.f32 %v142, %v1101
  %1103 = vmatmul.f32.gmra.mxu0 %v322
  %v1104 = vpop.f32.mrf.mxu0
  %v1105 = vadd.f32 %v142, %v1104
  %1106 = vmatmul.f32.gmra.mxu0 %v325
  %v1107 = vpop.f32.mrf.mxu0
  %v1108 = vadd.f32 %v142, %v1107
  %1109 = vmatmul.f32.gmra.mxu0 %v328
  %v1110 = vpop.f32.mrf.mxu0
  %v1111 = vadd.f32 %v142, %v1110
  %1112 = vmatmul.f32.gmra.mxu0 %v331
  %v1113 = vpop.f32.mrf.mxu0
  %v1114 = vadd.f32 %v142, %v1113
  %1115 = vmatmul.f32.gmra.mxu0 %v334
  %v1116 = vpop.f32.mrf.mxu0
  %v1117 = vadd.f32 %v142, %v1116
  %1118 = vmatmul.f32.gmra.mxu0 %v337
  %v1119 = vpop.f32.mrf.mxu0
  %v1120 = vadd.f32 %v142, %v1119
  %1121 = vmatmul.f32.gmra.mxu0 %v340
  %v1122 = vpop.f32.mrf.mxu0
  %v1123 = vadd.f32 %v142, %v1122
  %1124 = vmatmul.f32.gmra.mxu0 %v343
  %v1125 = vpop.f32.mrf.mxu0
  %v1126 = vadd.f32 %v142, %v1125
  %1127 = vmatmul.f32.gmra.mxu0 %v346
  %v1128 = vpop.f32.mrf.mxu0
  %v1129 = vadd.f32 %v142, %v1128
  %1130 = vmatmul.f32.gmra.mxu0 %v349
  %v1131 = vpop.f32.mrf.mxu0
  %v1132 = vadd.f32 %v142, %v1131
  %1133 = vmatmul.f32.gmra.mxu0 %v352
  %v1134 = vpop.f32.mrf.mxu0
  %v1135 = vadd.f32 %v142, %v1134
  %1136 = vmatmul.f32.gmra.mxu0 %v355
  %v1137 = vpop.f32.mrf.mxu0
  %v1138 = vadd.f32 %v142, %v1137
  %1139 = vmatmul.f32.gmra.mxu0 %v358
  %v1140 = vpop.f32.mrf.mxu0
  %v1141 = vadd.f32 %v142, %v1140
  %1142 = vmatmul.f32.gmra.mxu0 %v361
  %v1143 = vpop.f32.mrf.mxu0
  %v1144 = vadd.f32 %v142, %v1143
  %1145 = vmatmul.f32.gmra.mxu0 %v364
  %v1146 = vpop.f32.mrf.mxu0
  %v1147 = vadd.f32 %v142, %v1146
  %1148 = vmatmul.f32.gmra.mxu0 %v367
  %v1149 = vpop.f32.mrf.mxu0
  %v1150 = vadd.f32 %v142, %v1149
  %1151 = vmatmul.f32.gmra.mxu0 %v370
  %v1152 = vpop.f32.mrf.mxu0
  %v1153 = vadd.f32 %v142, %v1152
  %1154 = vmatmul.f32.gmra.mxu0 %v373
  %v1155 = vpop.f32.mrf.mxu0
  %v1156 = vadd.f32 %v142, %v1155
  %1157 = vmatmul.f32.gmra.mxu0 %v376
  %v1158 = vpop.f32.mrf.mxu0
  %v1159 = vadd.f32 %v142, %v1158
  %1160 = vmatmul.f32.gmra.mxu0 %v379
  %v1161 = vpop.f32.mrf.mxu0
  %v1162 = vadd.f32 %v142, %v1161
  %1163 = vmatmul.f32.gmra.mxu0 %v382
  %v1164 = vpop.f32.mrf.mxu0
  %v1165 = vadd.f32 %v142, %v1164
  %1166 = vmatmul.f32.gmra.mxu0 %v385
  %v1167 = vpop.f32.mrf.mxu0
  %v1168 = vadd.f32 %v142, %v1167
  %1169 = vmatmul.f32.gmra.mxu0 %v388
  %v1170 = vpop.f32.mrf.mxu0
  %v1171 = vadd.f32 %v142, %v1170
  %1172 = vmatmul.f32.gmra.mxu0 %v391
  %v1173 = vpop.f32.mrf.mxu0
  %v1174 = vadd.f32 %v142, %v1173
  %1175 = vmatmul.f32.gmra.mxu0 %v394
  %v1176 = vpop.f32.mrf.mxu0
  %v1177 = vadd.f32 %v142, %v1176
  %1178 = vmatmul.f32.gmra.mxu0 %v397
  %v1179 = vpop.f32.mrf.mxu0
  %v1180 = vadd.f32 %v142, %v1179
  %1181 = vmatmul.f32.gmra.mxu0 %v400
  %v1182 = vpop.f32.mrf.mxu0
  %v1183 = vadd.f32 %v142, %v1182
  %1184 = vmatmul.f32.gmra.mxu0 %v403
  %v1185 = vpop.f32.mrf.mxu0
  %v1186 = vadd.f32 %v142, %v1185
  %1187 = vmatmul.f32.gmra.mxu0 %v406
  %v1188 = vpop.f32.mrf.mxu0
  %v1189 = vadd.f32 %v142, %v1188
  %1190 = vmatmul.f32.gmra.mxu0 %v409
  %v1191 = vpop.f32.mrf.mxu0
  %v1192 = vadd.f32 %v142, %v1191
  %1193 = vmatmul.f32.gmra.mxu0 %v412
  %v1194 = vpop.f32.mrf.mxu0
  %v1195 = vadd.f32 %v142, %v1194
  %1196 = vmatmul.f32.gmra.mxu0 %v415
  %v1197 = vpop.f32.mrf.mxu0
  %v1198 = vadd.f32 %v142, %v1197
  %1199 = vmatmul.f32.gmra.mxu0 %v418
  %v1200 = vpop.f32.mrf.mxu0
  %v1201 = vadd.f32 %v142, %v1200
  %1202 = vmatmul.f32.gmra.mxu0 %v421
  %v1203 = vpop.f32.mrf.mxu0
  %v1204 = vadd.f32 %v142, %v1203
  %1205 = vmatmul.f32.gmra.mxu0 %v424
  %v1206 = vpop.f32.mrf.mxu0
  %v1207 = vadd.f32 %v142, %v1206
  %1208 = vmatmul.f32.gmra.mxu0 %v427
  %v1209 = vpop.f32.mrf.mxu0
  %v1210 = vadd.f32 %v142, %v1209
  %1211 = vmatmul.f32.gmra.mxu0 %v430
  %v1212 = vpop.f32.mrf.mxu0
  %v1213 = vadd.f32 %v142, %v1212
  %1214 = vmatmul.f32.gmra.mxu0 %v433
  %v1215 = vpop.f32.mrf.mxu0
  %v1216 = vadd.f32 %v142, %v1215
  %1217 = vmatmul.f32.gmra.mxu0 %v436
  %v1218 = vpop.f32.mrf.mxu0
  %v1219 = vadd.f32 %v142, %v1218
  %1220 = vmatmul.f32.gmra.mxu0 %v439
  %v1221 = vpop.f32.mrf.mxu0
  %v1222 = vadd.f32 %v142, %v1221
  %1223 = vmatmul.f32.gmra.mxu0 %v442
  %v1224 = vpop.f32.mrf.mxu0
  %v1225 = vadd.f32 %v142, %v1224
  %1226 = vmatmul.f32.gmra.mxu0 %v445
  %v1227 = vpop.f32.mrf.mxu0
  %v1228 = vadd.f32 %v142, %v1227
  %1229 = vmatmul.f32.gmra.mxu0 %v448
  %v1230 = vpop.f32.mrf.mxu0
  %v1231 = vadd.f32 %v142, %v1230
  %1232 = vmatmul.f32.gmra.mxu0 %v451
  %v1233 = vpop.f32.mrf.mxu0
  %v1234 = vadd.f32 %v142, %v1233
  %1235 = vmatmul.f32.gmra.mxu0 %v454
  %v1236 = vpop.f32.mrf.mxu0
  %v1237 = vadd.f32 %v142, %v1236
  %1238 = vmatmul.f32.gmra.mxu0 %v457
  %v1239 = vpop.f32.mrf.mxu0
  %v1240 = vadd.f32 %v142, %v1239
  %1241 = vmatmul.f32.gmra.mxu0 %v460
  %v1242 = vpop.f32.mrf.mxu0
  %v1243 = vadd.f32 %v142, %v1242
  %1244 = vmatmul.f32.gmra.mxu0 %v463
  %v1245 = vpop.f32.mrf.mxu0
  %v1246 = vadd.f32 %v142, %v1245
  %1247 = vmatmul.f32.gmra.mxu0 %v466
  %v1248 = vpop.f32.mrf.mxu0
  %v1249 = vadd.f32 %v142, %v1248
  %1250 = vmatmul.f32.gmra.mxu0 %v469
  %v1251 = vpop.f32.mrf.mxu0
  %v1252 = vadd.f32 %v142, %v1251
  %1253 = vmatmul.f32.gmra.mxu0 %v472
  %v1254 = vpop.f32.mrf.mxu0
  %v1255 = vadd.f32 %v142, %v1254
  %1256 = vmatmul.f32.gmra.mxu0 %v475
  %v1257 = vpop.f32.mrf.mxu0
  %v1258 = vadd.f32 %v142, %v1257
  %1259 = vmatmul.f32.gmra.mxu0 %v478
  %v1260 = vpop.f32.mrf.mxu0
  %v1261 = vadd.f32 %v142, %v1260
  %1262 = vmatmul.f32.gmra.mxu0 %v481
  %v1263 = vpop.f32.mrf.mxu0
  %v1264 = vadd.f32 %v142, %v1263
  %1265 = vmatmul.f32.gmra.mxu0 %v484
  %v1266 = vpop.f32.mrf.mxu0
  %v1267 = vadd.f32 %v142, %v1266
  %1268 = vmatmul.f32.gmra.mxu0 %v487
  %v1269 = vpop.f32.mrf.mxu0
  %v1270 = vadd.f32 %v142, %v1269
  %1271 = vmatmul.f32.gmra.mxu0 %v490
  %v1272 = vpop.f32.mrf.mxu0
  %v1273 = vadd.f32 %v142, %v1272
  %1274 = vmatmul.f32.gmra.mxu0 %v493
  %v1275 = vpop.f32.mrf.mxu0
  %v1276 = vadd.f32 %v142, %v1275
  %1277 = vmatmul.f32.gmra.mxu0 %v496
  %v1278 = vpop.f32.mrf.mxu0
  %v1279 = vadd.f32 %v142, %v1278
  %1280 = vmatmul.f32.gmra.mxu0 %v499
  %v1281 = vpop.f32.mrf.mxu0
  %v1282 = vadd.f32 %v142, %v1281
  %1283 = vmatmul.f32.gmra.mxu0 %v502
  %v1284 = vpop.f32.mrf.mxu0
  %v1285 = vadd.f32 %v142, %v1284
  %1286 = vmatmul.f32.gmra.mxu0 %v505
  %v1287 = vpop.f32.mrf.mxu0
  %v1288 = vadd.f32 %v142, %v1287
  %1289 = vmatmul.f32.gmra.mxu0 %v508
  %v1290 = vpop.f32.mrf.mxu0
  %v1291 = vadd.f32 %v142, %v1290
  %1292 = vmatmul.f32.gmra.mxu0 %v511
  %v1293 = vpop.f32.mrf.mxu0
  %v1294 = vadd.f32 %v142, %v1293
  %1295 = vmatmul.f32.gmra.mxu0 %v514
  %v1296 = vpop.f32.mrf.mxu0
  %v1297 = vadd.f32 %v142, %v1296
  %1298 = vmatmul.f32.gmra.mxu0 %v517
  %v1299 = vpop.f32.mrf.mxu0
  %v1300 = vadd.f32 %v142, %v1299
  %1301 = vmatmul.f32.gmra.mxu0 %v520
  %v1302 = vpop.f32.mrf.mxu0
  %v1303 = vadd.f32 %v142, %v1302
  %1304 = vdwg.mxu0
  %1305 = vst [vmem:[%s3] sm:$0xff] %v545
  %vm1306 = vcmask 523264
  %1307 = vst.msk [vmem:[%s3 + $0x8] sm:$0xff] %vm1306, %v934
  %1308 = vst [vmem:[%s3 + $0x10] sm:$0xff] %v548
  %1309 = vst.msk [vmem:[%s3 + $0x18] sm:$0xff] %vm1306, %v937
  %1310 = vst [vmem:[%s3 + $0x20] sm:$0xff] %v551
  %1311 = vst.msk [vmem:[%s3 + $0x28] sm:$0xff] %vm1306, %v940
  %1312 = vst [vmem:[%s3 + $0x30] sm:$0xff] %v554
  %1313 = vst.msk [vmem:[%s3 + $0x38] sm:$0xff] %vm1306, %v943
  %1314 = vst [vmem:[%s3 + $0x40] sm:$0xff] %v557
  %1315 = vst.msk [vmem:[%s3 + $0x48] sm:$0xff] %vm1306, %v946
  %1316 = vst [vmem:[%s3 + $0x50] sm:$0xff] %v560
  %1317 = vst.msk [vmem:[%s3 + $0x58] sm:$0xff] %vm1306, %v949
  %1318 = vst [vmem:[%s3 + $0x60] sm:$0xff] %v563
  %1319 = vst.msk [vmem:[%s3 + $0x68] sm:$0xff] %vm1306, %v952
  %1320 = vst [vmem:[%s3 + $0x70] sm:$0xff] %v566
  %1321 = vst.msk [vmem:[%s3 + $0x78] sm:$0xff] %vm1306, %v955
  %1322 = vst [vmem:[%s3 + $0x80] sm:$0xff] %v569
  %1323 = vst.msk [vmem:[%s3 + $0x88] sm:$0xff] %vm1306, %v958
  %1324 = vst [vmem:[%s3 + $0x90] sm:$0xff] %v572
  %1325 = vst.msk [vmem:[%s3 + $0x98] sm:$0xff] %vm1306, %v961
  %1326 = vst [vmem:[%s3 + $0xa0] sm:$0xff] %v575
  %1327 = vst.msk [vmem:[%s3 + $0xa8] sm:$0xff] %vm1306, %v964
  %1328 = vst [vmem:[%s3 + $0xb0] sm:$0xff] %v578
  %1329 = vst.msk [vmem:[%s3 + $0xb8] sm:$0xff] %vm1306, %v967
  %1330 = vst [vmem:[%s3 + $0xc0] sm:$0xff] %v581
  %1331 = vst.msk [vmem:[%s3 + $0xc8] sm:$0xff] %vm1306, %v970
  %1332 = vst [vmem:[%s3 + $0xd0] sm:$0xff] %v584
  %1333 = vst.msk [vmem:[%s3 + $0xd8] sm:$0xff] %vm1306, %v973
  %1334 = vst [vmem:[%s3 + $0xe0] sm:$0xff] %v587
  %1335 = vst.msk [vmem:[%s3 + $0xe8] sm:$0xff] %vm1306, %v976
  %1336 = vst [vmem:[%s3 + $0xf0] sm:$0xff] %v590
  %1337 = vst.msk [vmem:[%s3 + $0xf8] sm:$0xff] %vm1306, %v979
  %1338 = vst [vmem:[%s3 + $0x100] sm:$0xff] %v593
  %1339 = vst.msk [vmem:[%s3 + $0x108] sm:$0xff] %vm1306, %v982
  %1340 = vst [vmem:[%s3 + $0x110] sm:$0xff] %v596
  %1341 = vst.msk [vmem:[%s3 + $0x118] sm:$0xff] %vm1306, %v985
  %1342 = vst [vmem:[%s3 + $0x120] sm:$0xff] %v599
  %1343 = vst.msk [vmem:[%s3 + $0x128] sm:$0xff] %vm1306, %v988
  %1344 = vst [vmem:[%s3 + $0x130] sm:$0xff] %v602
  %1345 = vst.msk [vmem:[%s3 + $0x138] sm:$0xff] %vm1306, %v991
  %1346 = vst [vmem:[%s3 + $0x140] sm:$0xff] %v605
  %1347 = vst.msk [vmem:[%s3 + $0x148] sm:$0xff] %vm1306, %v994
  %1348 = vst [vmem:[%s3 + $0x150] sm:$0xff] %v608
  %1349 = vst.msk [vmem:[%s3 + $0x158] sm:$0xff] %vm1306, %v997
  %1350 = vst [vmem:[%s3 + $0x160] sm:$0xff] %v611
  %1351 = vst.msk [vmem:[%s3 + $0x168] sm:$0xff] %vm1306, %v1000
  %1352 = vst [vmem:[%s3 + $0x170] sm:$0xff] %v614
  %1353 = vst.msk [vmem:[%s3 + $0x178] sm:$0xff] %vm1306, %v1003
  %1354 = vst [vmem:[%s3 + $0x180] sm:$0xff] %v617
  %1355 = vst.msk [vmem:[%s3 + $0x188] sm:$0xff] %vm1306, %v1006
  %1356 = vst [vmem:[%s3 + $0x190] sm:$0xff] %v620
  %1357 = vst.msk [vmem:[%s3 + $0x198] sm:$0xff] %vm1306, %v1009
  %1358 = vst [vmem:[%s3 + $0x1a0] sm:$0xff] %v623
  %1359 = vst.msk [vmem:[%s3 + $0x1a8] sm:$0xff] %vm1306, %v1012
  %1360 = vst [vmem:[%s3 + $0x1b0] sm:$0xff] %v626
  %1361 = vst.msk [vmem:[%s3 + $0x1b8] sm:$0xff] %vm1306, %v1015
  %1362 = vst [vmem:[%s3 + $0x1c0] sm:$0xff] %v629
  %1363 = vst.msk [vmem:[%s3 + $0x1c8] sm:$0xff] %vm1306, %v1018
  %1364 = vst [vmem:[%s3 + $0x1d0] sm:$0xff] %v632
  %1365 = vst.msk [vmem:[%s3 + $0x1d8] sm:$0xff] %vm1306, %v1021
  %1366 = vst [vmem:[%s3 + $0x1e0] sm:$0xff] %v635
  %1367 = vst.msk [vmem:[%s3 + $0x1e8] sm:$0xff] %vm1306, %v1024
  %1368 = vst [vmem:[%s3 + $0x1f0] sm:$0xff] %v638
  %1369 = vst.msk [vmem:[%s3 + $0x1f8] sm:$0xff] %vm1306, %v1027
  %1370 = vst [vmem:[%s3 + $0x200] sm:$0xff] %v641
  %1371 = vst.msk [vmem:[%s3 + $0x208] sm:$0xff] %vm1306, %v1030
  %1372 = vst [vmem:[%s3 + $0x210] sm:$0xff] %v644
  %1373 = vst.msk [vmem:[%s3 + $0x218] sm:$0xff] %vm1306, %v1033
  %1374 = vst [vmem:[%s3 + $0x220] sm:$0xff] %v647
  %1375 = vst.msk [vmem:[%s3 + $0x228] sm:$0xff] %vm1306, %v1036
  %1376 = vst [vmem:[%s3 + $0x230] sm:$0xff] %v650
  %1377 = vst.msk [vmem:[%s3 + $0x238] sm:$0xff] %vm1306, %v1039
  %1378 = vst [vmem:[%s3 + $0x240] sm:$0xff] %v653
  %1379 = vst.msk [vmem:[%s3 + $0x248] sm:$0xff] %vm1306, %v1042
  %1380 = vst [vmem:[%s3 + $0x250] sm:$0xff] %v656
  %1381 = vst.msk [vmem:[%s3 + $0x258] sm:$0xff] %vm1306, %v1045
  %1382 = vst [vmem:[%s3 + $0x260] sm:$0xff] %v659
  %1383 = vst.msk [vmem:[%s3 + $0x268] sm:$0xff] %vm1306, %v1048
  %1384 = vst [vmem:[%s3 + $0x270] sm:$0xff] %v662
  %1385 = vst.msk [vmem:[%s3 + $0x278] sm:$0xff] %vm1306, %v1051
  %1386 = vst [vmem:[%s3 + $0x280] sm:$0xff] %v665
  %1387 = vst.msk [vmem:[%s3 + $0x288] sm:$0xff] %vm1306, %v1054
  %1388 = vst [vmem:[%s3 + $0x290] sm:$0xff] %v668
  %1389 = vst.msk [vmem:[%s3 + $0x298] sm:$0xff] %vm1306, %v1057
  %1390 = vst [vmem:[%s3 + $0x2a0] sm:$0xff] %v671
  %1391 = vst.msk [vmem:[%s3 + $0x2a8] sm:$0xff] %vm1306, %v1060
  %1392 = vst [vmem:[%s3 + $0x2b0] sm:$0xff] %v674
  %1393 = vst.msk [vmem:[%s3 + $0x2b8] sm:$0xff] %vm1306, %v1063
  %1394 = vst [vmem:[%s3 + $0x2c0] sm:$0xff] %v677
  %1395 = vst.msk [vmem:[%s3 + $0x2c8] sm:$0xff] %vm1306, %v1066
  %1396 = vst [vmem:[%s3 + $0x2d0] sm:$0xff] %v680
  %1397 = vst.msk [vmem:[%s3 + $0x2d8] sm:$0xff] %vm1306, %v1069
  %1398 = vst [vmem:[%s3 + $0x2e0] sm:$0xff] %v683
  %1399 = vst.msk [vmem:[%s3 + $0x2e8] sm:$0xff] %vm1306, %v1072
  %1400 = vst [vmem:[%s3 + $0x2f0] sm:$0xff] %v686
  %1401 = vst.msk [vmem:[%s3 + $0x2f8] sm:$0xff] %vm1306, %v1075
  %1402 = vst [vmem:[%s3 + $0x300] sm:$0xff] %v689
  %1403 = vst.msk [vmem:[%s3 + $0x308] sm:$0xff] %vm1306, %v1078
  %1404 = vst [vmem:[%s3 + $0x310] sm:$0xff] %v692
  %1405 = vst.msk [vmem:[%s3 + $0x318] sm:$0xff] %vm1306, %v1081
  %1406 = vst [vmem:[%s3 + $0x320] sm:$0xff] %v695
  %1407 = vst.msk [vmem:[%s3 + $0x328] sm:$0xff] %vm1306, %v1084
  %1408 = vst [vmem:[%s3 + $0x330] sm:$0xff] %v698
  %1409 = vst.msk [vmem:[%s3 + $0x338] sm:$0xff] %vm1306, %v1087
  %1410 = vst [vmem:[%s3 + $0x340] sm:$0xff] %v701
  %1411 = vst.msk [vmem:[%s3 + $0x348] sm:$0xff] %vm1306, %v1090
  %1412 = vst [vmem:[%s3 + $0x350] sm:$0xff] %v704
  %1413 = vst.msk [vmem:[%s3 + $0x358] sm:$0xff] %vm1306, %v1093
  %1414 = vst [vmem:[%s3 + $0x360] sm:$0xff] %v707
  %1415 = vst.msk [vmem:[%s3 + $0x368] sm:$0xff] %vm1306, %v1096
  %1416 = vst [vmem:[%s3 + $0x370] sm:$0xff] %v710
  %1417 = vst.msk [vmem:[%s3 + $0x378] sm:$0xff] %vm1306, %v1099
  %1418 = vst [vmem:[%s3 + $0x380] sm:$0xff] %v713
  %1419 = vst.msk [vmem:[%s3 + $0x388] sm:$0xff] %vm1306, %v1102
  %1420 = vst [vmem:[%s3 + $0x390] sm:$0xff] %v716
  %1421 = vst.msk [vmem:[%s3 + $0x398] sm:$0xff] %vm1306, %v1105
  %1422 = vst [vmem:[%s3 + $0x3a0] sm:$0xff] %v719
  %1423 = vst.msk [vmem:[%s3 + $0x3a8] sm:$0xff] %vm1306, %v1108
  %1424 = vst [vmem:[%s3 + $0x3b0] sm:$0xff] %v722
  %1425 = vst.msk [vmem:[%s3 + $0x3b8] sm:$0xff] %vm1306, %v1111
  %1426 = vst [vmem:[%s3 + $0x3c0] sm:$0xff] %v725
  %1427 = vst.msk [vmem:[%s3 + $0x3c8] sm:$0xff] %vm1306, %v1114
  %1428 = vst [vmem:[%s3 + $0x3d0] sm:$0xff] %v728
  %1429 = vst.msk [vmem:[%s3 + $0x3d8] sm:$0xff] %vm1306, %v1117
  %1430 = vst [vmem:[%s3 + $0x3e0] sm:$0xff] %v731
  %1431 = vst.msk [vmem:[%s3 + $0x3e8] sm:$0xff] %vm1306, %v1120
  %1432 = vst [vmem:[%s3 + $0x3f0] sm:$0xff] %v734
  %1433 = vst.msk [vmem:[%s3 + $0x3f8] sm:$0xff] %vm1306, %v1123
  %1434 = vst [vmem:[%s3 + $0x400] sm:$0xff] %v737
  %1435 = vst.msk [vmem:[%s3 + $0x408] sm:$0xff] %vm1306, %v1126
  %1436 = vst [vmem:[%s3 + $0x410] sm:$0xff] %v740
  %1437 = vst.msk [vmem:[%s3 + $0x418] sm:$0xff] %vm1306, %v1129
  %1438 = vst [vmem:[%s3 + $0x420] sm:$0xff] %v743
  %1439 = vst.msk [vmem:[%s3 + $0x428] sm:$0xff] %vm1306, %v1132
  %1440 = vst [vmem:[%s3 + $0x430] sm:$0xff] %v746
  %1441 = vst.msk [vmem:[%s3 + $0x438] sm:$0xff] %vm1306, %v1135
  %1442 = vst [vmem:[%s3 + $0x440] sm:$0xff] %v749
  %1443 = vst.msk [vmem:[%s3 + $0x448] sm:$0xff] %vm1306, %v1138
  %1444 = vst [vmem:[%s3 + $0x450] sm:$0xff] %v752
  %1445 = vst.msk [vmem:[%s3 + $0x458] sm:$0xff] %vm1306, %v1141
  %1446 = vst [vmem:[%s3 + $0x460] sm:$0xff] %v755
  %1447 = vst.msk [vmem:[%s3 + $0x468] sm:$0xff] %vm1306, %v1144
  %1448 = vst [vmem:[%s3 + $0x470] sm:$0xff] %v758
  %1449 = vst.msk [vmem:[%s3 + $0x478] sm:$0xff] %vm1306, %v1147
  %1450 = vst [vmem:[%s3 + $0x480] sm:$0xff] %v761
  %1451 = vst.msk [vmem:[%s3 + $0x488] sm:$0xff] %vm1306, %v1150
  %1452 = vst [vmem:[%s3 + $0x490] sm:$0xff] %v764
  %1453 = vst.msk [vmem:[%s3 + $0x498] sm:$0xff] %vm1306, %v1153
  %1454 = vst [vmem:[%s3 + $0x4a0] sm:$0xff] %v767
  %1455 = vst.msk [vmem:[%s3 + $0x4a8] sm:$0xff] %vm1306, %v1156
  %1456 = vst [vmem:[%s3 + $0x4b0] sm:$0xff] %v770
  %1457 = vst.msk [vmem:[%s3 + $0x4b8] sm:$0xff] %vm1306, %v1159
  %1458 = vst [vmem:[%s3 + $0x4c0] sm:$0xff] %v773
  %1459 = vst.msk [vmem:[%s3 + $0x4c8] sm:$0xff] %vm1306, %v1162
  %1460 = vst [vmem:[%s3 + $0x4d0] sm:$0xff] %v776
  %1461 = vst.msk [vmem:[%s3 + $0x4d8] sm:$0xff] %vm1306, %v1165
  %1462 = vst [vmem:[%s3 + $0x4e0] sm:$0xff] %v779
  %1463 = vst.msk [vmem:[%s3 + $0x4e8] sm:$0xff] %vm1306, %v1168
  %1464 = vst [vmem:[%s3 + $0x4f0] sm:$0xff] %v782
  %1465 = vst.msk [vmem:[%s3 + $0x4f8] sm:$0xff] %vm1306, %v1171
  %1466 = vst [vmem:[%s3 + $0x500] sm:$0xff] %v785
  %1467 = vst.msk [vmem:[%s3 + $0x508] sm:$0xff] %vm1306, %v1174
  %1468 = vst [vmem:[%s3 + $0x510] sm:$0xff] %v788
  %1469 = vst.msk [vmem:[%s3 + $0x518] sm:$0xff] %vm1306, %v1177
  %1470 = vst [vmem:[%s3 + $0x520] sm:$0xff] %v791
  %1471 = vst.msk [vmem:[%s3 + $0x528] sm:$0xff] %vm1306, %v1180
  %1472 = vst [vmem:[%s3 + $0x530] sm:$0xff] %v794
  %1473 = vst.msk [vmem:[%s3 + $0x538] sm:$0xff] %vm1306, %v1183
  %1474 = vst [vmem:[%s3 + $0x540] sm:$0xff] %v797
  %1475 = vst.msk [vmem:[%s3 + $0x548] sm:$0xff] %vm1306, %v1186
  %1476 = vst [vmem:[%s3 + $0x550] sm:$0xff] %v800
  %1477 = vst.msk [vmem:[%s3 + $0x558] sm:$0xff] %vm1306, %v1189
  %1478 = vst [vmem:[%s3 + $0x560] sm:$0xff] %v803
  %1479 = vst.msk [vmem:[%s3 + $0x568] sm:$0xff] %vm1306, %v1192
  %1480 = vst [vmem:[%s3 + $0x570] sm:$0xff] %v806
  %1481 = vst.msk [vmem:[%s3 + $0x578] sm:$0xff] %vm1306, %v1195
  %1482 = vst [vmem:[%s3 + $0x580] sm:$0xff] %v809
  %1483 = vst.msk [vmem:[%s3 + $0x588] sm:$0xff] %vm1306, %v1198
  %1484 = vst [vmem:[%s3 + $0x590] sm:$0xff] %v812
  %1485 = vst.msk [vmem:[%s3 + $0x598] sm:$0xff] %vm1306, %v1201
  %1486 = vst [vmem:[%s3 + $0x5a0] sm:$0xff] %v815
  %1487 = vst.msk [vmem:[%s3 + $0x5a8] sm:$0xff] %vm1306, %v1204
  %1488 = vst [vmem:[%s3 + $0x5b0] sm:$0xff] %v818
  %1489 = vst.msk [vmem:[%s3 + $0x5b8] sm:$0xff] %vm1306, %v1207
  %1490 = vst [vmem:[%s3 + $0x5c0] sm:$0xff] %v821
  %1491 = vst.msk [vmem:[%s3 + $0x5c8] sm:$0xff] %vm1306, %v1210
  %1492 = vst [vmem:[%s3 + $0x5d0] sm:$0xff] %v824
  %1493 = vst.msk [vmem:[%s3 + $0x5d8] sm:$0xff] %vm1306, %v1213
  %1494 = vst [vmem:[%s3 + $0x5e0] sm:$0xff] %v827
  %1495 = vst.msk [vmem:[%s3 + $0x5e8] sm:$0xff] %vm1306, %v1216
  %1496 = vst [vmem:[%s3 + $0x5f0] sm:$0xff] %v830
  %1497 = vst.msk [vmem:[%s3 + $0x5f8] sm:$0xff] %vm1306, %v1219
  %1498 = vst [vmem:[%s3 + $0x600] sm:$0xff] %v833
  %1499 = vst.msk [vmem:[%s3 + $0x608] sm:$0xff] %vm1306, %v1222
  %1500 = vst [vmem:[%s3 + $0x610] sm:$0xff] %v836
  %1501 = vst.msk [vmem:[%s3 + $0x618] sm:$0xff] %vm1306, %v1225
  %1502 = vst [vmem:[%s3 + $0x620] sm:$0xff] %v839
  %1503 = vst.msk [vmem:[%s3 + $0x628] sm:$0xff] %vm1306, %v1228
  %1504 = vst [vmem:[%s3 + $0x630] sm:$0xff] %v842
  %1505 = vst.msk [vmem:[%s3 + $0x638] sm:$0xff] %vm1306, %v1231
  %1506 = vst [vmem:[%s3 + $0x640] sm:$0xff] %v845
  %1507 = vst.msk [vmem:[%s3 + $0x648] sm:$0xff] %vm1306, %v1234
  %1508 = vst [vmem:[%s3 + $0x650] sm:$0xff] %v848
  %1509 = vst.msk [vmem:[%s3 + $0x658] sm:$0xff] %vm1306, %v1237
  %1510 = vst [vmem:[%s3 + $0x660] sm:$0xff] %v851
  %1511 = vst.msk [vmem:[%s3 + $0x668] sm:$0xff] %vm1306, %v1240
  %1512 = vst [vmem:[%s3 + $0x670] sm:$0xff] %v854
  %1513 = vst.msk [vmem:[%s3 + $0x678] sm:$0xff] %vm1306, %v1243
  %1514 = vst [vmem:[%s3 + $0x680] sm:$0xff] %v857
  %1515 = vst.msk [vmem:[%s3 + $0x688] sm:$0xff] %vm1306, %v1246
  %1516 = vst [vmem:[%s3 + $0x690] sm:$0xff] %v860
  %1517 = vst.msk [vmem:[%s3 + $0x698] sm:$0xff] %vm1306, %v1249
  %1518 = vst [vmem:[%s3 + $0x6a0] sm:$0xff] %v863
  %1519 = vst.msk [vmem:[%s3 + $0x6a8] sm:$0xff] %vm1306, %v1252
  %1520 = vst [vmem:[%s3 + $0x6b0] sm:$0xff] %v866
  %1521 = vst.msk [vmem:[%s3 + $0x6b8] sm:$0xff] %vm1306, %v1255
  %1522 = vst [vmem:[%s3 + $0x6c0] sm:$0xff] %v869
  %1523 = vst.msk [vmem:[%s3 + $0x6c8] sm:$0xff] %vm1306, %v1258
  %1524 = vst [vmem:[%s3 + $0x6d0] sm:$0xff] %v872
  %1525 = vst.msk [vmem:[%s3 + $0x6d8] sm:$0xff] %vm1306, %v1261
  %1526 = vst [vmem:[%s3 + $0x6e0] sm:$0xff] %v875
  %1527 = vst.msk [vmem:[%s3 + $0x6e8] sm:$0xff] %vm1306, %v1264
  %1528 = vst [vmem:[%s3 + $0x6f0] sm:$0xff] %v878
  %1529 = vst.msk [vmem:[%s3 + $0x6f8] sm:$0xff] %vm1306, %v1267
  %1530 = vst [vmem:[%s3 + $0x700] sm:$0xff] %v881
  %1531 = vst.msk [vmem:[%s3 + $0x708] sm:$0xff] %vm1306, %v1270
  %1532 = vst [vmem:[%s3 + $0x710] sm:$0xff] %v884
  %1533 = vst.msk [vmem:[%s3 + $0x718] sm:$0xff] %vm1306, %v1273
  %1534 = vst [vmem:[%s3 + $0x720] sm:$0xff] %v887
  %1535 = vst.msk [vmem:[%s3 + $0x728] sm:$0xff] %vm1306, %v1276
  %1536 = vst [vmem:[%s3 + $0x730] sm:$0xff] %v890
  %1537 = vst.msk [vmem:[%s3 + $0x738] sm:$0xff] %vm1306, %v1279
  %1538 = vst [vmem:[%s3 + $0x740] sm:$0xff] %v893
  %1539 = vst.msk [vmem:[%s3 + $0x748] sm:$0xff] %vm1306, %v1282
  %1540 = vst [vmem:[%s3 + $0x750] sm:$0xff] %v896
  %1541 = vst.msk [vmem:[%s3 + $0x758] sm:$0xff] %vm1306, %v1285
  %1542 = vst [vmem:[%s3 + $0x760] sm:$0xff] %v899
  %1543 = vst.msk [vmem:[%s3 + $0x768] sm:$0xff] %vm1306, %v1288
  %1544 = vst [vmem:[%s3 + $0x770] sm:$0xff] %v902
  %1545 = vst.msk [vmem:[%s3 + $0x778] sm:$0xff] %vm1306, %v1291
  %1546 = vst [vmem:[%s3 + $0x780] sm:$0xff] %v905
  %1547 = vst.msk [vmem:[%s3 + $0x788] sm:$0xff] %vm1306, %v1294
  %1548 = vst [vmem:[%s3 + $0x790] sm:$0xff] %v908
  %1549 = vst.msk [vmem:[%s3 + $0x798] sm:$0xff] %vm1306, %v1297
  %1550 = vst [vmem:[%s3 + $0x7a0] sm:$0xff] %v911
  %1551 = vst.msk [vmem:[%s3 + $0x7a8] sm:$0xff] %vm1306, %v1300
  %1552 = vst [vmem:[%s3 + $0x7b0] sm:$0xff] %v914
  %1553 = vst.msk [vmem:[%s3 + $0x7b8] sm:$0xff] %vm1306, %v1303
  // Predicated region
  $region14: #{tpu_custom_call.1} parent=0 // pred_check
    _
  $region15: #{tpu_custom_call.1} parent=0 // pred_check_branch
    %1555 = sbr.rel (0) target = $region17
  $region16: #{tpu_custom_call.1} parent=0 // pred_region
    _
  $region17: #{tpu_custom_call.1} parent=0 // pred_fallthru
    _
  // Predicated region
  $region18: #{tpu_custom_call.1} parent=0 // pred_check
    _
  $region19: #{tpu_custom_call.1} parent=0 // pred_check_branch
    %1557 = sbr.rel (0) target = $region21
  $region20: #{tpu_custom_call.1} parent=0 // pred_region
    _
  $region21: #{tpu_custom_call.1} parent=0 // pred_fallthru
    _

</llo_original>
